<compile_context>
chip_gen: v6e
topology: v6e:2x2x1
jax: 0.10.0
libtpu: 0.0.40
codegen_flags: <defaults>
</compile_context>

<pallas_src>
import functools
import math

import jax
import jax.numpy as jnp
from jax.experimental import pallas as pl
from jax.experimental.pallas import tpu as pltpu

# ---------------- config (small, consistent with the module's forward) -------
VOCAB = 100
HIDDEN = 32
N_LAYERS = 2
N_HEADS = 2
HEAD_DIM = HIDDEN // N_HEADS
INTERMEDIATE = 64
MAX_POS = 16
TYPE_VOCAB = 2
N_CATEGORIES = 3
C_PAD = 128            # lane-dense classifier output (sliced to N_CATEGORIES outside)
LN_EPS = 1e-12


def _gelu(x):
    # TODO(synk): HF BERT uses erf-based GELU; tanh approximation used for lowering robustness.
    c = math.sqrt(2.0 / math.pi)
    return 0.5 * x * (1.0 + jnp.tanh(c * (x + 0.044715 * x * x * x)))


def _layer_norm(x, g, b):
    mu = jnp.mean(x, axis=-1, keepdims=True)
    var = jnp.mean(jnp.square(x - mu), axis=-1, keepdims=True)
    return (x - mu) * jax.lax.rsqrt(var + LN_EPS) * g + b


# ---------------- the single fused kernel (one batch element per grid step) --
def _bert_kernel(emb_ref, mask_ref,
                 emb_ln_g_ref, emb_ln_b_ref,
                 wqkv_ref, bqkv_ref, wo_ref, bo_ref,
                 ln1_g_ref, ln1_b_ref,
                 w1_ref, b1_ref, w2_ref, b2_ref,
                 ln2_g_ref, ln2_b_ref,
                 pool_w_ref, pool_b_ref, cls_w_ref, cls_b_ref,
                 out_ref):
    scale = 1.0 / math.sqrt(HEAD_DIM)

    # Embedding LayerNorm (no zeros-residual DMA).
    h = _layer_norm(emb_ref[0], emb_ln_g_ref[...], emb_ln_b_ref[...])   # [S, H] f32
    mask = mask_ref[0]                                                  # [1, S] additive

    for l in range(N_LAYERS):            # static unroll; weights stay VMEM-resident
        # ---- fused QKV projection: one [S, H] x [H, 3H] MXU pass ----
        h16 = h.astype(jnp.bfloat16)
        qkv = jnp.dot(h16, wqkv_ref[l],
                      preferred_element_type=jnp.float32) + bqkv_ref[l]  # [S, 3H] f32

        # ---- multi-head self-attention; contexts lane-concat'ed, one Wo matmul ----
        ctxs = []
        for hd in range(N_HEADS):
            c0 = hd * HEAD_DIM
            q = qkv[:, c0:c0 + HEAD_DIM]                                 # [S, HD]
            k = qkv[:, HIDDEN + c0:HIDDEN + c0 + HEAD_DIM]
            v = qkv[:, 2 * HIDDEN + c0:2 * HIDDEN + c0 + HEAD_DIM]
            s = jnp.einsum("qd,kd->qk", q, k,
                           preferred_element_type=jnp.float32) * scale + mask
            s = s - jnp.max(s, axis=-1, keepdims=True)
            p = jnp.exp(s)
            p = p * pl.reciprocal(jnp.sum(p, axis=-1, keepdims=True), approx=True)
            ctxs.append(jnp.dot(p, v, preferred_element_type=jnp.float32))  # [S, HD]
        ctx = jnp.concatenate(ctxs, axis=-1)                             # [S, H] in vregs
        attn = jnp.dot(ctx.astype(jnp.bfloat16), wo_ref[l],
                       preferred_element_type=jnp.float32) + bo_ref[l]   # [S, H]
        h = _layer_norm(attn + h, ln1_g_ref[l], ln1_b_ref[l])            # add + LN fused

        # ---- FFN: the [S, INTERMEDIATE] activation never leaves VMEM/vregs ----
        t = jnp.dot(h.astype(jnp.bfloat16), w1_ref[l],
                    preferred_element_type=jnp.float32) + b1_ref[l]
        t = _gelu(t)
        t = jnp.dot(t.astype(jnp.bfloat16), w2_ref[l],
                    preferred_element_type=jnp.float32) + b2_ref[l]
        h = _layer_norm(t + h, ln2_g_ref[l], ln2_b_ref[l])

    # ---- pooler (tanh on [CLS]) + classifier, fused; lane-dense padded output ----
    cls_h = h[0:1, :]                                                    # [1, H]
    pooled = jnp.tanh(jnp.dot(cls_h.astype(jnp.bfloat16), pool_w_ref[...],
                              preferred_element_type=jnp.float32) + pool_b_ref[...])
    logits = jnp.dot(pooled.astype(jnp.bfloat16), cls_w_ref[...],
                     preferred_element_type=jnp.float32) + cls_b_ref[...]  # [1, C_PAD]
    out_ref[...] = logits[None]


# ---------------- forward wrapper ---------------------------------------------
def bert_sentiment_forward(params, input_ids, attention_mask, token_type_ids):
    B, S = input_ids.shape
    # Embedding gathers stay in XLA (no clean Pallas gather needed at this size).
    emb = (params["word_emb"][input_ids]
           + params["pos_emb"][jnp.arange(S)][None, :, :]
           + params["type_emb"][token_type_ids]).astype(jnp.float32)     # [B, S, H]
    mask_add = ((1.0 - attention_mask.astype(jnp.float32)) * -10000.0
                ).reshape(B, 1, S)

    def rep(x):  # replicated full-array weight block (same block for every grid step)
        nd = x.ndim
        return pl.BlockSpec(x.shape, lambda b, nd=nd: (0,) * nd)

    weight_args = (
        params["emb_ln_g"], params["emb_ln_b"],
        params["wqkv"], params["bqkv"], params["wo"], params["bo"],
        params["ln1_g"], params["ln1_b"],
        params["w1"], params["b1"], params["w2"], params["b2"],
        params["ln2_g"], params["ln2_b"],
        params["pool_w"], params["pool_b"], params["cls_w"], params["cls_b"],
    )

    out = pl.pallas_call(
        _bert_kernel,
        out_shape=jax.ShapeDtypeStruct((B, 1, C_PAD), jnp.float32),
        grid=(B,),
        in_specs=[pl.BlockSpec((1, S, HIDDEN), lambda b: (b, 0, 0)),
                  pl.BlockSpec((1, 1, S), lambda b: (b, 0, 0))]
                 + [rep(w) for w in weight_args],
        out_specs=pl.BlockSpec((1, 1, C_PAD), lambda b: (b, 0, 0)),
        compiler_params=pltpu.CompilerParams(
            dimension_semantics=("parallel",)),
    )(emb, mask_add, *weight_args)

    return out[:, 0, :N_CATEGORIES]


# ---------------- pure-JAX reference (same math, exact-reciprocal softmax) ----
def bert_sentiment_reference(params, input_ids, attention_mask, token_type_ids):
    B, S = input_ids.shape
    emb = (params["word_emb"][input_ids]
           + params["pos_emb"][jnp.arange(S)][None, :, :]
           + params["type_emb"][token_type_ids]).astype(jnp.float32)
    mask_add = ((1.0 - attention_mask.astype(jnp.float32)) * -10000.0
                ).reshape(B, 1, S)
    scale = 1.0 / math.sqrt(HEAD_DIM)

    def dot16(a, w):
        return jnp.dot(a.astype(jnp.bfloat16), w, preferred_element_type=jnp.float32)

    outs = []
    for b in range(B):
        h = _layer_norm(emb[b], params["emb_ln_g"], params["emb_ln_b"])
        mask = mask_add[b]
        for l in range(N_LAYERS):
            qkv = dot16(h, params["wqkv"][l]) + params["bqkv"][l]
            ctxs = []
            for hd in range(N_HEADS):
                c0 = hd * HEAD_DIM
                q = qkv[:, c0:c0 + HEAD_DIM]
                k = qkv[:, HIDDEN + c0:HIDDEN + c0 + HEAD_DIM]
                v = qkv[:, 2 * HIDDEN + c0:2 * HIDDEN + c0 + HEAD_DIM]
                s = jnp.einsum("qd,kd->qk", q, k) * scale + mask
                p = jax.nn.softmax(s, axis=-1)
                ctxs.append(jnp.dot(p, v))
            ctx = jnp.concatenate(ctxs, axis=-1)
            attn = dot16(ctx, params["wo"][l]) + params["bo"][l]
            h = _layer_norm(attn + h, params["ln1_g"][l], params["ln1_b"][l])
            t = dot16(h, params["w1"][l]) + params["b1"][l]
            t = _gelu(t)
            t = dot16(t, params["w2"][l]) + params["b2"][l]
            h = _layer_norm(t + h, params["ln2_g"][l], params["ln2_b"][l])
        pooled = jnp.tanh(dot16(h[0:1, :], params["pool_w"]) + params["pool_b"])
        logits = dot16(pooled, params["cls_w"]) + params["cls_b"]
        outs.append(logits[0, :N_CATEGORIES])
    return jnp.stack(outs)


# ---------------- deterministic parameter init --------------------------------
def init_params(key):
    def nrm(k, shape):
        return (0.02 * jax.random.normal(k, shape)).astype(jnp.float32)

    keys = iter(jax.random.split(key, 6 * N_LAYERS + 8))

    wqkv_l, wo_l, w1_l, w2_l = [], [], [], []
    for _ in range(N_LAYERS):
        wq = nrm(next(keys), (HIDDEN, HIDDEN))
        wk = nrm(next(keys), (HIDDEN, HIDDEN))
        wv = nrm(next(keys), (HIDDEN, HIDDEN))
        wqkv_l.append(jnp.concatenate([wq, wk, wv], axis=1))             # [H, 3H]
        wo_l.append(nrm(next(keys), (HIDDEN, HIDDEN)))                   # [H, H]
        w1_l.append(nrm(next(keys), (HIDDEN, INTERMEDIATE)))
        w2_l.append(nrm(next(keys), (INTERMEDIATE, HIDDEN)))

    cls_w = nrm(next(keys), (HIDDEN, N_CATEGORIES))
    cls_w_pad = jnp.zeros((HIDDEN, C_PAD), jnp.float32).at[:, :N_CATEGORIES].set(cls_w)

    params = {
        "word_emb": nrm(next(keys), (VOCAB, HIDDEN)),
        "pos_emb": nrm(next(keys), (MAX_POS, HIDDEN)),
        "type_emb": nrm(next(keys), (TYPE_VOCAB, HIDDEN)),
        "emb_ln_g": jnp.ones((1, HIDDEN), jnp.float32),
        "emb_ln_b": jnp.zeros((1, HIDDEN), jnp.float32),
        "wqkv": jnp.stack(wqkv_l).astype(jnp.bfloat16),                  # [L, H, 3H]
        "bqkv": jnp.zeros((N_LAYERS, 1, 3 * HIDDEN), jnp.float32),
        "wo": jnp.stack(wo_l).astype(jnp.bfloat16),                      # [L, H, H]
        "bo": jnp.zeros((N_LAYERS, 1, HIDDEN), jnp.float32),
        "ln1_g": jnp.ones((N_LAYERS, 1, HIDDEN), jnp.float32),
        "ln1_b": jnp.zeros((N_LAYERS, 1, HIDDEN), jnp.float32),
        "w1": jnp.stack(w1_l).astype(jnp.bfloat16),                      # [L, H, I]
        "b1": jnp.zeros((N_LAYERS, 1, INTERMEDIATE), jnp.float32),
        "w2": jnp.stack(w2_l).astype(jnp.bfloat16),                      # [L, I, H]
        "b2": jnp.zeros((N_LAYERS, 1, HIDDEN), jnp.float32),
        "ln2_g": jnp.ones((N_LAYERS, 1, HIDDEN), jnp.float32),
        "ln2_b": jnp.zeros((N_LAYERS, 1, HIDDEN), jnp.float32),
        "pool_w": nrm(next(keys), (HIDDEN, HIDDEN)).astype(jnp.bfloat16),
        "pool_b": jnp.zeros((1, HIDDEN), jnp.float32),
        "cls_w": cls_w_pad.astype(jnp.bfloat16),                         # [H, 128] padded
        "cls_b": jnp.zeros((1, C_PAD), jnp.float32),
    }
    return params


if __name__ == "__main__":
    B, S = 2, 8
    key = jax.random.PRNGKey(0)
    k_param, k_ids, _ = jax.random.split(key, 3)

    params = init_params(k_param)
    input_ids = jax.random.randint(k_ids, (B, S), 0, VOCAB, dtype=jnp.int32)
    attention_mask = jnp.ones((B, S), dtype=jnp.int32).at[1, -2:].set(0)  # pad 2 tokens
    token_type_ids = jnp.concatenate(
        [jnp.zeros((B, S // 2), jnp.int32), jnp.ones((B, S // 2), jnp.int32)], axis=1)

    fwd = jax.jit(functools.partial(bert_sentiment_forward, params))
    logits = jax.block_until_ready(fwd(input_ids, attention_mask, token_type_ids))

    assert logits.shape == (B, N_CATEGORIES), logits.shape
    assert bool(jnp.all(jnp.isfinite(logits)))

    # Correctness check against the pure-JAX reference (exact-reciprocal softmax).
    ref = bert_sentiment_reference(params, input_ids, attention_mask, token_type_ids)
    assert jnp.allclose(logits, ref, atol=5e-3, rtol=5e-2), (logits, ref)

    print("KERNEL_OK")
</pallas_src>

<mosaic_0001>
module attributes {stable_mosaic.version = 11 : i64} {
  func.func @_bert_kernel(%arg0: i32, %arg1: memref<1x8x32xf32, #tpu.memory_space<vmem>>, %arg2: memref<1x1x8xf32, #tpu.memory_space<vmem>>, %arg3: memref<1x32xf32, #tpu.memory_space<vmem>>, %arg4: memref<1x32xf32, #tpu.memory_space<vmem>>, %arg5: memref<2x32x96xbf16, #tpu.memory_space<vmem>>, %arg6: memref<2x1x96xf32, #tpu.memory_space<vmem>>, %arg7: memref<2x32x32xbf16, #tpu.memory_space<vmem>>, %arg8: memref<2x1x32xf32, #tpu.memory_space<vmem>>, %arg9: memref<2x1x32xf32, #tpu.memory_space<vmem>>, %arg10: memref<2x1x32xf32, #tpu.memory_space<vmem>>, %arg11: memref<2x32x64xbf16, #tpu.memory_space<vmem>>, %arg12: memref<2x1x64xf32, #tpu.memory_space<vmem>>, %arg13: memref<2x64x32xbf16, #tpu.memory_space<vmem>>, %arg14: memref<2x1x32xf32, #tpu.memory_space<vmem>>, %arg15: memref<2x1x32xf32, #tpu.memory_space<vmem>>, %arg16: memref<2x1x32xf32, #tpu.memory_space<vmem>>, %arg17: memref<32x32xbf16, #tpu.memory_space<vmem>>, %arg18: memref<1x32xf32, #tpu.memory_space<vmem>>, %arg19: memref<32x128xbf16, #tpu.memory_space<vmem>>, %arg20: memref<1x128xf32, #tpu.memory_space<vmem>>, %arg21: memref<1x1x128xf32, #tpu.memory_space<vmem>>) attributes {dimension_semantics = [#tpu.dimension_semantics<parallel>], iteration_bounds = array<i64: 2>, scalar_prefetch = 0 : i64, scratch_operands = 0 : i64, tpu.core_type = #tpu.core_type<tc>, window_params = [{transform_indices = @transform_0, window_bounds = array<i64: 1, 8, 32>}, {transform_indices = @transform_1, window_bounds = array<i64: 1, 1, 8>}, {pipeline_mode = #tpu.pipeline_mode<synchronous>, transform_indices = @transform_2, window_bounds = array<i64: 1, 32>}, {pipeline_mode = #tpu.pipeline_mode<synchronous>, transform_indices = @transform_3, window_bounds = array<i64: 1, 32>}, {pipeline_mode = #tpu.pipeline_mode<synchronous>, transform_indices = @transform_4, window_bounds = array<i64: 2, 32, 96>}, {pipeline_mode = #tpu.pipeline_mode<synchronous>, transform_indices = @transform_5, window_bounds = array<i64: 2, 1, 96>}, {pipeline_mode = #tpu.pipeline_mode<synchronous>, transform_indices = @transform_6, window_bounds = array<i64: 2, 32, 32>}, {pipeline_mode = #tpu.pipeline_mode<synchronous>, transform_indices = @transform_7, window_bounds = array<i64: 2, 1, 32>}, {pipeline_mode = #tpu.pipeline_mode<synchronous>, transform_indices = @transform_8, window_bounds = array<i64: 2, 1, 32>}, {pipeline_mode = #tpu.pipeline_mode<synchronous>, transform_indices = @transform_9, window_bounds = array<i64: 2, 1, 32>}, {pipeline_mode = #tpu.pipeline_mode<synchronous>, transform_indices = @transform_10, window_bounds = array<i64: 2, 32, 64>}, {pipeline_mode = #tpu.pipeline_mode<synchronous>, transform_indices = @transform_11, window_bounds = array<i64: 2, 1, 64>}, {pipeline_mode = #tpu.pipeline_mode<synchronous>, transform_indices = @transform_12, window_bounds = array<i64: 2, 64, 32>}, {pipeline_mode = #tpu.pipeline_mode<synchronous>, transform_indices = @transform_13, window_bounds = array<i64: 2, 1, 32>}, {pipeline_mode = #tpu.pipeline_mode<synchronous>, transform_indices = @transform_14, window_bounds = array<i64: 2, 1, 32>}, {pipeline_mode = #tpu.pipeline_mode<synchronous>, transform_indices = @transform_15, window_bounds = array<i64: 2, 1, 32>}, {pipeline_mode = #tpu.pipeline_mode<synchronous>, transform_indices = @transform_16, window_bounds = array<i64: 32, 32>}, {pipeline_mode = #tpu.pipeline_mode<synchronous>, transform_indices = @transform_17, window_bounds = array<i64: 1, 32>}, {pipeline_mode = #tpu.pipeline_mode<synchronous>, transform_indices = @transform_18, window_bounds = array<i64: 32, 128>}, {pipeline_mode = #tpu.pipeline_mode<synchronous>, transform_indices = @transform_19, window_bounds = array<i64: 1, 128>}, {transform_indices = @transform_20, window_bounds = array<i64: 1, 1, 128>}]} {
    %c0 = arith.constant 0 : index
    %c0_0 = arith.constant 0 : index
    %c0_1 = arith.constant 0 : index
    %0 = vector.load %arg1[%c0, %c0_0, %c0_1] : memref<1x8x32xf32, #tpu.memory_space<vmem>>, vector<1x8x32xf32>
    %1 = vector.shape_cast %0 : vector<1x8x32xf32> to vector<8x32xf32>
    %c0_2 = arith.constant 0 : index
    %c0_3 = arith.constant 0 : index
    %2 = vector.load %arg3[%c0_2, %c0_3] : memref<1x32xf32, #tpu.memory_space<vmem>>, vector<1x32xf32>
    %c0_4 = arith.constant 0 : index
    %c0_5 = arith.constant 0 : index
    %3 = vector.load %arg4[%c0_4, %c0_5] : memref<1x32xf32, #tpu.memory_space<vmem>>, vector<1x32xf32>
    %cst = arith.constant dense<0.000000e+00> : vector<8xf32>
    %4 = vector.multi_reduction <add>, %1, %cst [1] : vector<8x32xf32> to vector<8xf32>
    %5 = vector.shape_cast %4 : vector<8xf32> to vector<8x1xf32>
    %cst_6 = arith.constant 3.200000e+01 : f32
    %6 = vector.broadcast %cst_6 : f32 to vector<8x1xf32>
    %7 = arith.divf %5, %6 : vector<8x1xf32>
    %8 = vector.broadcast %7 : vector<8x1xf32> to vector<8x32xf32>
    %9 = arith.subf %1, %8 : vector<8x32xf32>
    %10 = arith.mulf %9, %9 : vector<8x32xf32>
    %cst_7 = arith.constant dense<0.000000e+00> : vector<8xf32>
    %11 = vector.multi_reduction <add>, %10, %cst_7 [1] : vector<8x32xf32> to vector<8xf32>
    %12 = vector.shape_cast %11 : vector<8xf32> to vector<8x1xf32>
    %cst_8 = arith.constant 3.200000e+01 : f32
    %13 = vector.broadcast %cst_8 : f32 to vector<8x1xf32>
    %14 = arith.divf %12, %13 : vector<8x1xf32>
    %15 = vector.broadcast %7 : vector<8x1xf32> to vector<8x32xf32>
    %16 = arith.subf %1, %15 : vector<8x32xf32>
    %cst_9 = arith.constant 9.99999996E-13 : f32
    %17 = vector.broadcast %cst_9 : f32 to vector<8x1xf32>
    %18 = arith.addf %14, %17 : vector<8x1xf32>
    %19 = math.rsqrt %18 : vector<8x1xf32>
    %20 = vector.broadcast %19 : vector<8x1xf32> to vector<8x32xf32>
    %21 = arith.mulf %16, %20 : vector<8x32xf32>
    %22 = vector.broadcast %2 : vector<1x32xf32> to vector<8x32xf32>
    %23 = arith.mulf %21, %22 : vector<8x32xf32>
    %24 = vector.broadcast %3 : vector<1x32xf32> to vector<8x32xf32>
    %25 = arith.addf %23, %24 : vector<8x32xf32>
    %c0_10 = arith.constant 0 : index
    %c0_11 = arith.constant 0 : index
    %c0_12 = arith.constant 0 : index
    %26 = vector.load %arg2[%c0_10, %c0_11, %c0_12] : memref<1x1x8xf32, #tpu.memory_space<vmem>>, vector<1x1x8xf32>
    %27 = vector.shape_cast %26 : vector<1x1x8xf32> to vector<1x8xf32>
    %28 = arith.truncf %25 : vector<8x32xf32> to vector<8x32xbf16>
    %c0_13 = arith.constant 0 : index
    %c0_14 = arith.constant 0 : index
    %c0_15 = arith.constant 0 : index
    %29 = vector.load %arg5[%c0_13, %c0_14, %c0_15] : memref<2x32x96xbf16, #tpu.memory_space<vmem>>, vector<1x32x96xbf16>
    %30 = vector.shape_cast %29 : vector<1x32x96xbf16> to vector<32x96xbf16>
    %cst_16 = arith.constant dense<0.000000e+00> : vector<8x96xf32>
    %31 = tpu.matmul %28, %30, %cst_16 {dimension_numbers = #tpu.dot_dimension_numbers<[1], [0], [0], [1], [0, 0, 1, 1], [], []>} : vector<8x32xbf16>, vector<32x96xbf16>, vector<8x96xf32> -> vector<8x96xf32>
    %c0_17 = arith.constant 0 : index
    %c0_18 = arith.constant 0 : index
    %c0_19 = arith.constant 0 : index
    %32 = vector.load %arg6[%c0_17, %c0_18, %c0_19] : memref<2x1x96xf32, #tpu.memory_space<vmem>>, vector<1x1x96xf32>
    %33 = vector.shape_cast %32 : vector<1x1x96xf32> to vector<1x96xf32>
    %34 = vector.broadcast %33 : vector<1x96xf32> to vector<8x96xf32>
    %35 = arith.addf %31, %34 : vector<8x96xf32>
    %36 = vector.extract_strided_slice %35 {offsets = [0, 0], sizes = [8, 16], strides = [1, 1]} : vector<8x96xf32> to vector<8x16xf32>
    %37 = vector.extract_strided_slice %35 {offsets = [0, 32], sizes = [8, 16], strides = [1, 1]} : vector<8x96xf32> to vector<8x16xf32>
    %38 = vector.extract_strided_slice %35 {offsets = [0, 64], sizes = [8, 16], strides = [1, 1]} : vector<8x96xf32> to vector<8x16xf32>
    "tpu.trace_start"() <{level = 10 : i32, message = "qd,kd->qk"}> : () -> ()
    %cst_20 = arith.constant dense<0.000000e+00> : vector<8x8xf32>
    %39 = tpu.matmul %36, %37, %cst_20 {dimension_numbers = #tpu.dot_dimension_numbers<[1], [1], [0], [0], [0, 0, 1, 0], [], []>} : vector<8x16xf32>, vector<8x16xf32>, vector<8x8xf32> -> vector<8x8xf32>
    "tpu.trace_stop"() : () -> ()
    %cst_21 = arith.constant 2.500000e-01 : f32
    %40 = vector.broadcast %cst_21 : f32 to vector<8x8xf32>
    %41 = arith.mulf %39, %40 : vector<8x8xf32>
    %42 = vector.broadcast %27 : vector<1x8xf32> to vector<8x8xf32>
    %43 = arith.addf %41, %42 : vector<8x8xf32>
    %cst_22 = arith.constant dense<0xFF800000> : vector<8xf32>
    %44 = vector.multi_reduction <maximumf>, %43, %cst_22 [1] : vector<8x8xf32> to vector<8xf32>
    %45 = vector.shape_cast %44 : vector<8xf32> to vector<8x1xf32>
    %46 = vector.broadcast %45 : vector<8x1xf32> to vector<8x8xf32>
    %47 = arith.subf %43, %46 : vector<8x8xf32>
    %48 = math.exp %47 : vector<8x8xf32>
    %cst_23 = arith.constant dense<0.000000e+00> : vector<8xf32>
    %49 = vector.multi_reduction <add>, %48, %cst_23 [1] : vector<8x8xf32> to vector<8xf32>
    %50 = vector.shape_cast %49 : vector<8xf32> to vector<8x1xf32>
    %51 = tpu.reciprocal %50 {approx = true} : vector<8x1xf32> -> vector<8x1xf32>
    %52 = vector.broadcast %51 : vector<8x1xf32> to vector<8x8xf32>
    %53 = arith.mulf %48, %52 : vector<8x8xf32>
    %cst_24 = arith.constant dense<0.000000e+00> : vector<8x16xf32>
    %54 = tpu.matmul %53, %38, %cst_24 {dimension_numbers = #tpu.dot_dimension_numbers<[1], [0], [0], [1], [0, 0, 1, 1], [], []>} : vector<8x8xf32>, vector<8x16xf32>, vector<8x16xf32> -> vector<8x16xf32>
    %55 = vector.extract_strided_slice %35 {offsets = [0, 16], sizes = [8, 16], strides = [1, 1]} : vector<8x96xf32> to vector<8x16xf32>
    %56 = vector.extract_strided_slice %35 {offsets = [0, 48], sizes = [8, 16], strides = [1, 1]} : vector<8x96xf32> to vector<8x16xf32>
    %57 = vector.extract_strided_slice %35 {offsets = [0, 80], sizes = [8, 16], strides = [1, 1]} : vector<8x96xf32> to vector<8x16xf32>
    "tpu.trace_start"() <{level = 10 : i32, message = "qd,kd->qk"}> : () -> ()
    %cst_25 = arith.constant dense<0.000000e+00> : vector<8x8xf32>
    %58 = tpu.matmul %55, %56, %cst_25 {dimension_numbers = #tpu.dot_dimension_numbers<[1], [1], [0], [0], [0, 0, 1, 0], [], []>} : vector<8x16xf32>, vector<8x16xf32>, vector<8x8xf32> -> vector<8x8xf32>
    "tpu.trace_stop"() : () -> ()
    %cst_26 = arith.constant 2.500000e-01 : f32
    %59 = vector.broadcast %cst_26 : f32 to vector<8x8xf32>
    %60 = arith.mulf %58, %59 : vector<8x8xf32>
    %61 = vector.broadcast %27 : vector<1x8xf32> to vector<8x8xf32>
    %62 = arith.addf %60, %61 : vector<8x8xf32>
    %cst_27 = arith.constant dense<0xFF800000> : vector<8xf32>
    %63 = vector.multi_reduction <maximumf>, %62, %cst_27 [1] : vector<8x8xf32> to vector<8xf32>
    %64 = vector.shape_cast %63 : vector<8xf32> to vector<8x1xf32>
    %65 = vector.broadcast %64 : vector<8x1xf32> to vector<8x8xf32>
    %66 = arith.subf %62, %65 : vector<8x8xf32>
    %67 = math.exp %66 : vector<8x8xf32>
    %cst_28 = arith.constant dense<0.000000e+00> : vector<8xf32>
    %68 = vector.multi_reduction <add>, %67, %cst_28 [1] : vector<8x8xf32> to vector<8xf32>
    %69 = vector.shape_cast %68 : vector<8xf32> to vector<8x1xf32>
    %70 = tpu.reciprocal %69 {approx = true} : vector<8x1xf32> -> vector<8x1xf32>
    %71 = vector.broadcast %70 : vector<8x1xf32> to vector<8x8xf32>
    %72 = arith.mulf %67, %71 : vector<8x8xf32>
    %cst_29 = arith.constant dense<0.000000e+00> : vector<8x16xf32>
    %73 = tpu.matmul %72, %57, %cst_29 {dimension_numbers = #tpu.dot_dimension_numbers<[1], [0], [0], [1], [0, 0, 1, 1], [], []>} : vector<8x8xf32>, vector<8x16xf32>, vector<8x16xf32> -> vector<8x16xf32>
    %74 = tpu.concatenate %54, %73 in 1 : vector<8x16xf32>, vector<8x16xf32> -> vector<8x32xf32>
    %75 = arith.truncf %74 : vector<8x32xf32> to vector<8x32xbf16>
    %c0_30 = arith.constant 0 : index
    %c0_31 = arith.constant 0 : index
    %c0_32 = arith.constant 0 : index
    %76 = vector.load %arg7[%c0_30, %c0_31, %c0_32] : memref<2x32x32xbf16, #tpu.memory_space<vmem>>, vector<1x32x32xbf16>
    %77 = vector.shape_cast %76 : vector<1x32x32xbf16> to vector<32x32xbf16>
    %cst_33 = arith.constant dense<0.000000e+00> : vector<8x32xf32>
    %78 = tpu.matmul %75, %77, %cst_33 {dimension_numbers = #tpu.dot_dimension_numbers<[1], [0], [0], [1], [0, 0, 1, 1], [], []>} : vector<8x32xbf16>, vector<32x32xbf16>, vector<8x32xf32> -> vector<8x32xf32>
    %c0_34 = arith.constant 0 : index
    %c0_35 = arith.constant 0 : index
    %c0_36 = arith.constant 0 : index
    %79 = vector.load %arg8[%c0_34, %c0_35, %c0_36] : memref<2x1x32xf32, #tpu.memory_space<vmem>>, vector<1x1x32xf32>
    %80 = vector.shape_cast %79 : vector<1x1x32xf32> to vector<1x32xf32>
    %81 = vector.broadcast %80 : vector<1x32xf32> to vector<8x32xf32>
    %82 = arith.addf %78, %81 : vector<8x32xf32>
    %83 = arith.addf %82, %25 : vector<8x32xf32>
    %c0_37 = arith.constant 0 : index
    %c0_38 = arith.constant 0 : index
    %c0_39 = arith.constant 0 : index
    %84 = vector.load %arg9[%c0_37, %c0_38, %c0_39] : memref<2x1x32xf32, #tpu.memory_space<vmem>>, vector<1x1x32xf32>
    %85 = vector.shape_cast %84 : vector<1x1x32xf32> to vector<1x32xf32>
    %c0_40 = arith.constant 0 : index
    %c0_41 = arith.constant 0 : index
    %c0_42 = arith.constant 0 : index
    %86 = vector.load %arg10[%c0_40, %c0_41, %c0_42] : memref<2x1x32xf32, #tpu.memory_space<vmem>>, vector<1x1x32xf32>
    %87 = vector.shape_cast %86 : vector<1x1x32xf32> to vector<1x32xf32>
    %cst_43 = arith.constant dense<0.000000e+00> : vector<8xf32>
    %88 = vector.multi_reduction <add>, %83, %cst_43 [1] : vector<8x32xf32> to vector<8xf32>
    %89 = vector.shape_cast %88 : vector<8xf32> to vector<8x1xf32>
    %cst_44 = arith.constant 3.200000e+01 : f32
    %90 = vector.broadcast %cst_44 : f32 to vector<8x1xf32>
    %91 = arith.divf %89, %90 : vector<8x1xf32>
    %92 = vector.broadcast %91 : vector<8x1xf32> to vector<8x32xf32>
    %93 = arith.subf %83, %92 : vector<8x32xf32>
    %94 = arith.mulf %93, %93 : vector<8x32xf32>
    %cst_45 = arith.constant dense<0.000000e+00> : vector<8xf32>
    %95 = vector.multi_reduction <add>, %94, %cst_45 [1] : vector<8x32xf32> to vector<8xf32>
    %96 = vector.shape_cast %95 : vector<8xf32> to vector<8x1xf32>
    %cst_46 = arith.constant 3.200000e+01 : f32
    %97 = vector.broadcast %cst_46 : f32 to vector<8x1xf32>
    %98 = arith.divf %96, %97 : vector<8x1xf32>
    %99 = vector.broadcast %91 : vector<8x1xf32> to vector<8x32xf32>
    %100 = arith.subf %83, %99 : vector<8x32xf32>
    %cst_47 = arith.constant 9.99999996E-13 : f32
    %101 = vector.broadcast %cst_47 : f32 to vector<8x1xf32>
    %102 = arith.addf %98, %101 : vector<8x1xf32>
    %103 = math.rsqrt %102 : vector<8x1xf32>
    %104 = vector.broadcast %103 : vector<8x1xf32> to vector<8x32xf32>
    %105 = arith.mulf %100, %104 : vector<8x32xf32>
    %106 = vector.broadcast %85 : vector<1x32xf32> to vector<8x32xf32>
    %107 = arith.mulf %105, %106 : vector<8x32xf32>
    %108 = vector.broadcast %87 : vector<1x32xf32> to vector<8x32xf32>
    %109 = arith.addf %107, %108 : vector<8x32xf32>
    %110 = arith.truncf %109 : vector<8x32xf32> to vector<8x32xbf16>
    %c0_48 = arith.constant 0 : index
    %c0_49 = arith.constant 0 : index
    %c0_50 = arith.constant 0 : index
    %111 = vector.load %arg11[%c0_48, %c0_49, %c0_50] : memref<2x32x64xbf16, #tpu.memory_space<vmem>>, vector<1x32x64xbf16>
    %112 = vector.shape_cast %111 : vector<1x32x64xbf16> to vector<32x64xbf16>
    %cst_51 = arith.constant dense<0.000000e+00> : vector<8x64xf32>
    %113 = tpu.matmul %110, %112, %cst_51 {dimension_numbers = #tpu.dot_dimension_numbers<[1], [0], [0], [1], [0, 0, 1, 1], [], []>} : vector<8x32xbf16>, vector<32x64xbf16>, vector<8x64xf32> -> vector<8x64xf32>
    %c0_52 = arith.constant 0 : index
    %c0_53 = arith.constant 0 : index
    %c0_54 = arith.constant 0 : index
    %114 = vector.load %arg12[%c0_52, %c0_53, %c0_54] : memref<2x1x64xf32, #tpu.memory_space<vmem>>, vector<1x1x64xf32>
    %115 = vector.shape_cast %114 : vector<1x1x64xf32> to vector<1x64xf32>
    %116 = vector.broadcast %115 : vector<1x64xf32> to vector<8x64xf32>
    %117 = arith.addf %113, %116 : vector<8x64xf32>
    %cst_55 = arith.constant 5.000000e-01 : f32
    %118 = vector.broadcast %cst_55 : f32 to vector<8x64xf32>
    %119 = arith.mulf %118, %117 : vector<8x64xf32>
    %cst_56 = arith.constant 4.471500e-02 : f32
    %120 = vector.broadcast %cst_56 : f32 to vector<8x64xf32>
    %121 = arith.mulf %120, %117 : vector<8x64xf32>
    %122 = arith.mulf %121, %117 : vector<8x64xf32>
    %123 = arith.mulf %122, %117 : vector<8x64xf32>
    %124 = arith.addf %117, %123 : vector<8x64xf32>
    %cst_57 = arith.constant 0.797884583 : f32
    %125 = vector.broadcast %cst_57 : f32 to vector<8x64xf32>
    %126 = arith.mulf %125, %124 : vector<8x64xf32>
    %127 = math.tanh %126 : vector<8x64xf32>
    %cst_58 = arith.constant 1.000000e+00 : f32
    %128 = vector.broadcast %cst_58 : f32 to vector<8x64xf32>
    %129 = arith.addf %128, %127 : vector<8x64xf32>
    %130 = arith.mulf %119, %129 : vector<8x64xf32>
    %131 = arith.truncf %130 : vector<8x64xf32> to vector<8x64xbf16>
    %c0_59 = arith.constant 0 : index
    %c0_60 = arith.constant 0 : index
    %c0_61 = arith.constant 0 : index
    %132 = vector.load %arg13[%c0_59, %c0_60, %c0_61] : memref<2x64x32xbf16, #tpu.memory_space<vmem>>, vector<1x64x32xbf16>
    %133 = vector.shape_cast %132 : vector<1x64x32xbf16> to vector<64x32xbf16>
    %cst_62 = arith.constant dense<0.000000e+00> : vector<8x32xf32>
    %134 = tpu.matmul %131, %133, %cst_62 {dimension_numbers = #tpu.dot_dimension_numbers<[1], [0], [0], [1], [0, 0, 1, 1], [], []>} : vector<8x64xbf16>, vector<64x32xbf16>, vector<8x32xf32> -> vector<8x32xf32>
    %c0_63 = arith.constant 0 : index
    %c0_64 = arith.constant 0 : index
    %c0_65 = arith.constant 0 : index
    %135 = vector.load %arg14[%c0_63, %c0_64, %c0_65] : memref<2x1x32xf32, #tpu.memory_space<vmem>>, vector<1x1x32xf32>
    %136 = vector.shape_cast %135 : vector<1x1x32xf32> to vector<1x32xf32>
    %137 = vector.broadcast %136 : vector<1x32xf32> to vector<8x32xf32>
    %138 = arith.addf %134, %137 : vector<8x32xf32>
    %139 = arith.addf %138, %109 : vector<8x32xf32>
    %c0_66 = arith.constant 0 : index
    %c0_67 = arith.constant 0 : index
    %c0_68 = arith.constant 0 : index
    %140 = vector.load %arg15[%c0_66, %c0_67, %c0_68] : memref<2x1x32xf32, #tpu.memory_space<vmem>>, vector<1x1x32xf32>
    %141 = vector.shape_cast %140 : vector<1x1x32xf32> to vector<1x32xf32>
    %c0_69 = arith.constant 0 : index
    %c0_70 = arith.constant 0 : index
    %c0_71 = arith.constant 0 : index
    %142 = vector.load %arg16[%c0_69, %c0_70, %c0_71] : memref<2x1x32xf32, #tpu.memory_space<vmem>>, vector<1x1x32xf32>
    %143 = vector.shape_cast %142 : vector<1x1x32xf32> to vector<1x32xf32>
    %cst_72 = arith.constant dense<0.000000e+00> : vector<8xf32>
    %144 = vector.multi_reduction <add>, %139, %cst_72 [1] : vector<8x32xf32> to vector<8xf32>
    %145 = vector.shape_cast %144 : vector<8xf32> to vector<8x1xf32>
    %cst_73 = arith.constant 3.200000e+01 : f32
    %146 = vector.broadcast %cst_73 : f32 to vector<8x1xf32>
    %147 = arith.divf %145, %146 : vector<8x1xf32>
    %148 = vector.broadcast %147 : vector<8x1xf32> to vector<8x32xf32>
    %149 = arith.subf %139, %148 : vector<8x32xf32>
    %150 = arith.mulf %149, %149 : vector<8x32xf32>
    %cst_74 = arith.constant dense<0.000000e+00> : vector<8xf32>
    %151 = vector.multi_reduction <add>, %150, %cst_74 [1] : vector<8x32xf32> to vector<8xf32>
    %152 = vector.shape_cast %151 : vector<8xf32> to vector<8x1xf32>
    %cst_75 = arith.constant 3.200000e+01 : f32
    %153 = vector.broadcast %cst_75 : f32 to vector<8x1xf32>
    %154 = arith.divf %152, %153 : vector<8x1xf32>
    %155 = vector.broadcast %147 : vector<8x1xf32> to vector<8x32xf32>
    %156 = arith.subf %139, %155 : vector<8x32xf32>
    %cst_76 = arith.constant 9.99999996E-13 : f32
    %157 = vector.broadcast %cst_76 : f32 to vector<8x1xf32>
    %158 = arith.addf %154, %157 : vector<8x1xf32>
    %159 = math.rsqrt %158 : vector<8x1xf32>
    %160 = vector.broadcast %159 : vector<8x1xf32> to vector<8x32xf32>
    %161 = arith.mulf %156, %160 : vector<8x32xf32>
    %162 = vector.broadcast %141 : vector<1x32xf32> to vector<8x32xf32>
    %163 = arith.mulf %161, %162 : vector<8x32xf32>
    %164 = vector.broadcast %143 : vector<1x32xf32> to vector<8x32xf32>
    %165 = arith.addf %163, %164 : vector<8x32xf32>
    %166 = arith.truncf %165 : vector<8x32xf32> to vector<8x32xbf16>
    %c1 = arith.constant 1 : index
    %c0_77 = arith.constant 0 : index
    %c0_78 = arith.constant 0 : index
    %167 = vector.load %arg5[%c1, %c0_77, %c0_78] : memref<2x32x96xbf16, #tpu.memory_space<vmem>>, vector<1x32x96xbf16>
    %168 = vector.shape_cast %167 : vector<1x32x96xbf16> to vector<32x96xbf16>
    %cst_79 = arith.constant dense<0.000000e+00> : vector<8x96xf32>
    %169 = tpu.matmul %166, %168, %cst_79 {dimension_numbers = #tpu.dot_dimension_numbers<[1], [0], [0], [1], [0, 0, 1, 1], [], []>} : vector<8x32xbf16>, vector<32x96xbf16>, vector<8x96xf32> -> vector<8x96xf32>
    %c1_80 = arith.constant 1 : index
    %c0_81 = arith.constant 0 : index
    %c0_82 = arith.constant 0 : index
    %170 = vector.load %arg6[%c1_80, %c0_81, %c0_82] : memref<2x1x96xf32, #tpu.memory_space<vmem>>, vector<1x1x96xf32>
    %171 = vector.shape_cast %170 : vector<1x1x96xf32> to vector<1x96xf32>
    %172 = vector.broadcast %171 : vector<1x96xf32> to vector<8x96xf32>
    %173 = arith.addf %169, %172 : vector<8x96xf32>
    %174 = vector.extract_strided_slice %173 {offsets = [0, 0], sizes = [8, 16], strides = [1, 1]} : vector<8x96xf32> to vector<8x16xf32>
    %175 = vector.extract_strided_slice %173 {offsets = [0, 32], sizes = [8, 16], strides = [1, 1]} : vector<8x96xf32> to vector<8x16xf32>
    %176 = vector.extract_strided_slice %173 {offsets = [0, 64], sizes = [8, 16], strides = [1, 1]} : vector<8x96xf32> to vector<8x16xf32>
    "tpu.trace_start"() <{level = 10 : i32, message = "qd,kd->qk"}> : () -> ()
    %cst_83 = arith.constant dense<0.000000e+00> : vector<8x8xf32>
    %177 = tpu.matmul %174, %175, %cst_83 {dimension_numbers = #tpu.dot_dimension_numbers<[1], [1], [0], [0], [0, 0, 1, 0], [], []>} : vector<8x16xf32>, vector<8x16xf32>, vector<8x8xf32> -> vector<8x8xf32>
    "tpu.trace_stop"() : () -> ()
    %cst_84 = arith.constant 2.500000e-01 : f32
    %178 = vector.broadcast %cst_84 : f32 to vector<8x8xf32>
    %179 = arith.mulf %177, %178 : vector<8x8xf32>
    %180 = vector.broadcast %27 : vector<1x8xf32> to vector<8x8xf32>
    %181 = arith.addf %179, %180 : vector<8x8xf32>
    %cst_85 = arith.constant dense<0xFF800000> : vector<8xf32>
    %182 = vector.multi_reduction <maximumf>, %181, %cst_85 [1] : vector<8x8xf32> to vector<8xf32>
    %183 = vector.shape_cast %182 : vector<8xf32> to vector<8x1xf32>
    %184 = vector.broadcast %183 : vector<8x1xf32> to vector<8x8xf32>
    %185 = arith.subf %181, %184 : vector<8x8xf32>
    %186 = math.exp %185 : vector<8x8xf32>
    %cst_86 = arith.constant dense<0.000000e+00> : vector<8xf32>
    %187 = vector.multi_reduction <add>, %186, %cst_86 [1] : vector<8x8xf32> to vector<8xf32>
    %188 = vector.shape_cast %187 : vector<8xf32> to vector<8x1xf32>
    %189 = tpu.reciprocal %188 {approx = true} : vector<8x1xf32> -> vector<8x1xf32>
    %190 = vector.broadcast %189 : vector<8x1xf32> to vector<8x8xf32>
    %191 = arith.mulf %186, %190 : vector<8x8xf32>
    %cst_87 = arith.constant dense<0.000000e+00> : vector<8x16xf32>
    %192 = tpu.matmul %191, %176, %cst_87 {dimension_numbers = #tpu.dot_dimension_numbers<[1], [0], [0], [1], [0, 0, 1, 1], [], []>} : vector<8x8xf32>, vector<8x16xf32>, vector<8x16xf32> -> vector<8x16xf32>
    %193 = vector.extract_strided_slice %173 {offsets = [0, 16], sizes = [8, 16], strides = [1, 1]} : vector<8x96xf32> to vector<8x16xf32>
    %194 = vector.extract_strided_slice %173 {offsets = [0, 48], sizes = [8, 16], strides = [1, 1]} : vector<8x96xf32> to vector<8x16xf32>
    %195 = vector.extract_strided_slice %173 {offsets = [0, 80], sizes = [8, 16], strides = [1, 1]} : vector<8x96xf32> to vector<8x16xf32>
    "tpu.trace_start"() <{level = 10 : i32, message = "qd,kd->qk"}> : () -> ()
    %cst_88 = arith.constant dense<0.000000e+00> : vector<8x8xf32>
    %196 = tpu.matmul %193, %194, %cst_88 {dimension_numbers = #tpu.dot_dimension_numbers<[1], [1], [0], [0], [0, 0, 1, 0], [], []>} : vector<8x16xf32>, vector<8x16xf32>, vector<8x8xf32> -> vector<8x8xf32>
    "tpu.trace_stop"() : () -> ()
    %cst_89 = arith.constant 2.500000e-01 : f32
    %197 = vector.broadcast %cst_89 : f32 to vector<8x8xf32>
    %198 = arith.mulf %196, %197 : vector<8x8xf32>
    %199 = vector.broadcast %27 : vector<1x8xf32> to vector<8x8xf32>
    %200 = arith.addf %198, %199 : vector<8x8xf32>
    %cst_90 = arith.constant dense<0xFF800000> : vector<8xf32>
    %201 = vector.multi_reduction <maximumf>, %200, %cst_90 [1] : vector<8x8xf32> to vector<8xf32>
    %202 = vector.shape_cast %201 : vector<8xf32> to vector<8x1xf32>
    %203 = vector.broadcast %202 : vector<8x1xf32> to vector<8x8xf32>
    %204 = arith.subf %200, %203 : vector<8x8xf32>
    %205 = math.exp %204 : vector<8x8xf32>
    %cst_91 = arith.constant dense<0.000000e+00> : vector<8xf32>
    %206 = vector.multi_reduction <add>, %205, %cst_91 [1] : vector<8x8xf32> to vector<8xf32>
    %207 = vector.shape_cast %206 : vector<8xf32> to vector<8x1xf32>
    %208 = tpu.reciprocal %207 {approx = true} : vector<8x1xf32> -> vector<8x1xf32>
    %209 = vector.broadcast %208 : vector<8x1xf32> to vector<8x8xf32>
    %210 = arith.mulf %205, %209 : vector<8x8xf32>
    %cst_92 = arith.constant dense<0.000000e+00> : vector<8x16xf32>
    %211 = tpu.matmul %210, %195, %cst_92 {dimension_numbers = #tpu.dot_dimension_numbers<[1], [0], [0], [1], [0, 0, 1, 1], [], []>} : vector<8x8xf32>, vector<8x16xf32>, vector<8x16xf32> -> vector<8x16xf32>
    %212 = tpu.concatenate %192, %211 in 1 : vector<8x16xf32>, vector<8x16xf32> -> vector<8x32xf32>
    %213 = arith.truncf %212 : vector<8x32xf32> to vector<8x32xbf16>
    %c1_93 = arith.constant 1 : index
    %c0_94 = arith.constant 0 : index
    %c0_95 = arith.constant 0 : index
    %214 = vector.load %arg7[%c1_93, %c0_94, %c0_95] : memref<2x32x32xbf16, #tpu.memory_space<vmem>>, vector<1x32x32xbf16>
    %215 = vector.shape_cast %214 : vector<1x32x32xbf16> to vector<32x32xbf16>
    %cst_96 = arith.constant dense<0.000000e+00> : vector<8x32xf32>
    %216 = tpu.matmul %213, %215, %cst_96 {dimension_numbers = #tpu.dot_dimension_numbers<[1], [0], [0], [1], [0, 0, 1, 1], [], []>} : vector<8x32xbf16>, vector<32x32xbf16>, vector<8x32xf32> -> vector<8x32xf32>
    %c1_97 = arith.constant 1 : index
    %c0_98 = arith.constant 0 : index
    %c0_99 = arith.constant 0 : index
    %217 = vector.load %arg8[%c1_97, %c0_98, %c0_99] : memref<2x1x32xf32, #tpu.memory_space<vmem>>, vector<1x1x32xf32>
    %218 = vector.shape_cast %217 : vector<1x1x32xf32> to vector<1x32xf32>
    %219 = vector.broadcast %218 : vector<1x32xf32> to vector<8x32xf32>
    %220 = arith.addf %216, %219 : vector<8x32xf32>
    %221 = arith.addf %220, %165 : vector<8x32xf32>
    %c1_100 = arith.constant 1 : index
    %c0_101 = arith.constant 0 : index
    %c0_102 = arith.constant 0 : index
    %222 = vector.load %arg9[%c1_100, %c0_101, %c0_102] : memref<2x1x32xf32, #tpu.memory_space<vmem>>, vector<1x1x32xf32>
    %223 = vector.shape_cast %222 : vector<1x1x32xf32> to vector<1x32xf32>
    %c1_103 = arith.constant 1 : index
    %c0_104 = arith.constant 0 : index
    %c0_105 = arith.constant 0 : index
    %224 = vector.load %arg10[%c1_103, %c0_104, %c0_105] : memref<2x1x32xf32, #tpu.memory_space<vmem>>, vector<1x1x32xf32>
    %225 = vector.shape_cast %224 : vector<1x1x32xf32> to vector<1x32xf32>
    %cst_106 = arith.constant dense<0.000000e+00> : vector<8xf32>
    %226 = vector.multi_reduction <add>, %221, %cst_106 [1] : vector<8x32xf32> to vector<8xf32>
    %227 = vector.shape_cast %226 : vector<8xf32> to vector<8x1xf32>
    %cst_107 = arith.constant 3.200000e+01 : f32
    %228 = vector.broadcast %cst_107 : f32 to vector<8x1xf32>
    %229 = arith.divf %227, %228 : vector<8x1xf32>
    %230 = vector.broadcast %229 : vector<8x1xf32> to vector<8x32xf32>
    %231 = arith.subf %221, %230 : vector<8x32xf32>
    %232 = arith.mulf %231, %231 : vector<8x32xf32>
    %cst_108 = arith.constant dense<0.000000e+00> : vector<8xf32>
    %233 = vector.multi_reduction <add>, %232, %cst_108 [1] : vector<8x32xf32> to vector<8xf32>
    %234 = vector.shape_cast %233 : vector<8xf32> to vector<8x1xf32>
    %cst_109 = arith.constant 3.200000e+01 : f32
    %235 = vector.broadcast %cst_109 : f32 to vector<8x1xf32>
    %236 = arith.divf %234, %235 : vector<8x1xf32>
    %237 = vector.broadcast %229 : vector<8x1xf32> to vector<8x32xf32>
    %238 = arith.subf %221, %237 : vector<8x32xf32>
    %cst_110 = arith.constant 9.99999996E-13 : f32
    %239 = vector.broadcast %cst_110 : f32 to vector<8x1xf32>
    %240 = arith.addf %236, %239 : vector<8x1xf32>
    %241 = math.rsqrt %240 : vector<8x1xf32>
    %242 = vector.broadcast %241 : vector<8x1xf32> to vector<8x32xf32>
    %243 = arith.mulf %238, %242 : vector<8x32xf32>
    %244 = vector.broadcast %223 : vector<1x32xf32> to vector<8x32xf32>
    %245 = arith.mulf %243, %244 : vector<8x32xf32>
    %246 = vector.broadcast %225 : vector<1x32xf32> to vector<8x32xf32>
    %247 = arith.addf %245, %246 : vector<8x32xf32>
    %248 = arith.truncf %247 : vector<8x32xf32> to vector<8x32xbf16>
    %c1_111 = arith.constant 1 : index
    %c0_112 = arith.constant 0 : index
    %c0_113 = arith.constant 0 : index
    %249 = vector.load %arg11[%c1_111, %c0_112, %c0_113] : memref<2x32x64xbf16, #tpu.memory_space<vmem>>, vector<1x32x64xbf16>
    %250 = vector.shape_cast %249 : vector<1x32x64xbf16> to vector<32x64xbf16>
    %cst_114 = arith.constant dense<0.000000e+00> : vector<8x64xf32>
    %251 = tpu.matmul %248, %250, %cst_114 {dimension_numbers = #tpu.dot_dimension_numbers<[1], [0], [0], [1], [0, 0, 1, 1], [], []>} : vector<8x32xbf16>, vector<32x64xbf16>, vector<8x64xf32> -> vector<8x64xf32>
    %c1_115 = arith.constant 1 : index
    %c0_116 = arith.constant 0 : index
    %c0_117 = arith.constant 0 : index
    %252 = vector.load %arg12[%c1_115, %c0_116, %c0_117] : memref<2x1x64xf32, #tpu.memory_space<vmem>>, vector<1x1x64xf32>
    %253 = vector.shape_cast %252 : vector<1x1x64xf32> to vector<1x64xf32>
    %254 = vector.broadcast %253 : vector<1x64xf32> to vector<8x64xf32>
    %255 = arith.addf %251, %254 : vector<8x64xf32>
    %cst_118 = arith.constant 5.000000e-01 : f32
    %256 = vector.broadcast %cst_118 : f32 to vector<8x64xf32>
    %257 = arith.mulf %256, %255 : vector<8x64xf32>
    %cst_119 = arith.constant 4.471500e-02 : f32
    %258 = vector.broadcast %cst_119 : f32 to vector<8x64xf32>
    %259 = arith.mulf %258, %255 : vector<8x64xf32>
    %260 = arith.mulf %259, %255 : vector<8x64xf32>
    %261 = arith.mulf %260, %255 : vector<8x64xf32>
    %262 = arith.addf %255, %261 : vector<8x64xf32>
    %cst_120 = arith.constant 0.797884583 : f32
    %263 = vector.broadcast %cst_120 : f32 to vector<8x64xf32>
    %264 = arith.mulf %263, %262 : vector<8x64xf32>
    %265 = math.tanh %264 : vector<8x64xf32>
    %cst_121 = arith.constant 1.000000e+00 : f32
    %266 = vector.broadcast %cst_121 : f32 to vector<8x64xf32>
    %267 = arith.addf %266, %265 : vector<8x64xf32>
    %268 = arith.mulf %257, %267 : vector<8x64xf32>
    %269 = arith.truncf %268 : vector<8x64xf32> to vector<8x64xbf16>
    %c1_122 = arith.constant 1 : index
    %c0_123 = arith.constant 0 : index
    %c0_124 = arith.constant 0 : index
    %270 = vector.load %arg13[%c1_122, %c0_123, %c0_124] : memref<2x64x32xbf16, #tpu.memory_space<vmem>>, vector<1x64x32xbf16>
    %271 = vector.shape_cast %270 : vector<1x64x32xbf16> to vector<64x32xbf16>
    %cst_125 = arith.constant dense<0.000000e+00> : vector<8x32xf32>
    %272 = tpu.matmul %269, %271, %cst_125 {dimension_numbers = #tpu.dot_dimension_numbers<[1], [0], [0], [1], [0, 0, 1, 1], [], []>} : vector<8x64xbf16>, vector<64x32xbf16>, vector<8x32xf32> -> vector<8x32xf32>
    %c1_126 = arith.constant 1 : index
    %c0_127 = arith.constant 0 : index
    %c0_128 = arith.constant 0 : index
    %273 = vector.load %arg14[%c1_126, %c0_127, %c0_128] : memref<2x1x32xf32, #tpu.memory_space<vmem>>, vector<1x1x32xf32>
    %274 = vector.shape_cast %273 : vector<1x1x32xf32> to vector<1x32xf32>
    %275 = vector.broadcast %274 : vector<1x32xf32> to vector<8x32xf32>
    %276 = arith.addf %272, %275 : vector<8x32xf32>
    %277 = arith.addf %276, %247 : vector<8x32xf32>
    %c1_129 = arith.constant 1 : index
    %c0_130 = arith.constant 0 : index
    %c0_131 = arith.constant 0 : index
    %278 = vector.load %arg15[%c1_129, %c0_130, %c0_131] : memref<2x1x32xf32, #tpu.memory_space<vmem>>, vector<1x1x32xf32>
    %279 = vector.shape_cast %278 : vector<1x1x32xf32> to vector<1x32xf32>
    %c1_132 = arith.constant 1 : index
    %c0_133 = arith.constant 0 : index
    %c0_134 = arith.constant 0 : index
    %280 = vector.load %arg16[%c1_132, %c0_133, %c0_134] : memref<2x1x32xf32, #tpu.memory_space<vmem>>, vector<1x1x32xf32>
    %281 = vector.shape_cast %280 : vector<1x1x32xf32> to vector<1x32xf32>
    %cst_135 = arith.constant dense<0.000000e+00> : vector<8xf32>
    %282 = vector.multi_reduction <add>, %277, %cst_135 [1] : vector<8x32xf32> to vector<8xf32>
    %283 = vector.shape_cast %282 : vector<8xf32> to vector<8x1xf32>
    %cst_136 = arith.constant 3.200000e+01 : f32
    %284 = vector.broadcast %cst_136 : f32 to vector<8x1xf32>
    %285 = arith.divf %283, %284 : vector<8x1xf32>
    %286 = vector.broadcast %285 : vector<8x1xf32> to vector<8x32xf32>
    %287 = arith.subf %277, %286 : vector<8x32xf32>
    %288 = arith.mulf %287, %287 : vector<8x32xf32>
    %cst_137 = arith.constant dense<0.000000e+00> : vector<8xf32>
    %289 = vector.multi_reduction <add>, %288, %cst_137 [1] : vector<8x32xf32> to vector<8xf32>
    %290 = vector.shape_cast %289 : vector<8xf32> to vector<8x1xf32>
    %cst_138 = arith.constant 3.200000e+01 : f32
    %291 = vector.broadcast %cst_138 : f32 to vector<8x1xf32>
    %292 = arith.divf %290, %291 : vector<8x1xf32>
    %293 = vector.broadcast %285 : vector<8x1xf32> to vector<8x32xf32>
    %294 = arith.subf %277, %293 : vector<8x32xf32>
    %cst_139 = arith.constant 9.99999996E-13 : f32
    %295 = vector.broadcast %cst_139 : f32 to vector<8x1xf32>
    %296 = arith.addf %292, %295 : vector<8x1xf32>
    %297 = math.rsqrt %296 : vector<8x1xf32>
    %298 = vector.broadcast %297 : vector<8x1xf32> to vector<8x32xf32>
    %299 = arith.mulf %294, %298 : vector<8x32xf32>
    %300 = vector.broadcast %279 : vector<1x32xf32> to vector<8x32xf32>
    %301 = arith.mulf %299, %300 : vector<8x32xf32>
    %302 = vector.broadcast %281 : vector<1x32xf32> to vector<8x32xf32>
    %303 = arith.addf %301, %302 : vector<8x32xf32>
    %304 = vector.extract_strided_slice %303 {offsets = [0, 0], sizes = [1, 32], strides = [1, 1]} : vector<8x32xf32> to vector<1x32xf32>
    %305 = arith.truncf %304 : vector<1x32xf32> to vector<1x32xbf16>
    %c0_140 = arith.constant 0 : index
    %c0_141 = arith.constant 0 : index
    %306 = vector.load %arg17[%c0_140, %c0_141] : memref<32x32xbf16, #tpu.memory_space<vmem>>, vector<32x32xbf16>
    %cst_142 = arith.constant dense<0.000000e+00> : vector<1x32xf32>
    %307 = tpu.matmul %305, %306, %cst_142 {dimension_numbers = #tpu.dot_dimension_numbers<[1], [0], [0], [1], [0, 0, 1, 1], [], []>} : vector<1x32xbf16>, vector<32x32xbf16>, vector<1x32xf32> -> vector<1x32xf32>
    %c0_143 = arith.constant 0 : index
    %c0_144 = arith.constant 0 : index
    %308 = vector.load %arg18[%c0_143, %c0_144] : memref<1x32xf32, #tpu.memory_space<vmem>>, vector<1x32xf32>
    %309 = arith.addf %307, %308 : vector<1x32xf32>
    %310 = math.tanh %309 : vector<1x32xf32>
    %311 = arith.truncf %310 : vector<1x32xf32> to vector<1x32xbf16>
    %c0_145 = arith.constant 0 : index
    %c0_146 = arith.constant 0 : index
    %312 = vector.load %arg19[%c0_145, %c0_146] : memref<32x128xbf16, #tpu.memory_space<vmem>>, vector<32x128xbf16>
    %cst_147 = arith.constant dense<0.000000e+00> : vector<1x128xf32>
    %313 = tpu.matmul %311, %312, %cst_147 {dimension_numbers = #tpu.dot_dimension_numbers<[1], [0], [0], [1], [0, 0, 1, 1], [], []>} : vector<1x32xbf16>, vector<32x128xbf16>, vector<1x128xf32> -> vector<1x128xf32>
    %c0_148 = arith.constant 0 : index
    %c0_149 = arith.constant 0 : index
    %314 = vector.load %arg20[%c0_148, %c0_149] : memref<1x128xf32, #tpu.memory_space<vmem>>, vector<1x128xf32>
    %315 = arith.addf %313, %314 : vector<1x128xf32>
    %316 = vector.shape_cast %315 : vector<1x128xf32> to vector<1x1x128xf32>
    %c0_150 = arith.constant 0 : index
    %c0_151 = arith.constant 0 : index
    %c0_152 = arith.constant 0 : index
    %317 = vector.load %arg21[%c0_150, %c0_151, %c0_152] : memref<1x1x128xf32, #tpu.memory_space<vmem>>, vector<1x1x128xf32>
    tpu.vector_store %arg21[%c0_150, %c0_151, %c0_152], %316 {strides = array<i32>} : memref<1x1x128xf32, #tpu.memory_space<vmem>>, vector<1x1x128xf32>,
    return
  }
  func.func @transform_0(%arg0: i32) -> (i32, i32, i32) {
    %c0_i32 = arith.constant 0 : i32
    %c0_i32_0 = arith.constant 0 : i32
    %c0_i32_1 = arith.constant 0 : i32
    return %arg0, %c0_i32, %c0_i32_0 : i32, i32, i32
  }
  func.func @transform_1(%arg0: i32) -> (i32, i32, i32) {
    %c0_i32 = arith.constant 0 : i32
    %c0_i32_0 = arith.constant 0 : i32
    %c0_i32_1 = arith.constant 0 : i32
    return %arg0, %c0_i32, %c0_i32_0 : i32, i32, i32
  }
  func.func @transform_2(%arg0: i32) -> (i32, i32) {
    %c0_i32 = arith.constant 0 : i32
    %c0_i32_0 = arith.constant 0 : i32
    %c0_i32_1 = arith.constant 0 : i32
    return %c0_i32, %c0_i32_0 : i32, i32
  }
  func.func @transform_3(%arg0: i32) -> (i32, i32) {
    %c0_i32 = arith.constant 0 : i32
    %c0_i32_0 = arith.constant 0 : i32
    %c0_i32_1 = arith.constant 0 : i32
    return %c0_i32, %c0_i32_0 : i32, i32
  }
  func.func @transform_4(%arg0: i32) -> (i32, i32, i32) {
    %c0_i32 = arith.constant 0 : i32
    %c0_i32_0 = arith.constant 0 : i32
    %c0_i32_1 = arith.constant 0 : i32
    %c0_i32_2 = arith.constant 0 : i32
    return %c0_i32, %c0_i32_0, %c0_i32_1 : i32, i32, i32
  }
  func.func @transform_5(%arg0: i32) -> (i32, i32, i32) {
    %c0_i32 = arith.constant 0 : i32
    %c0_i32_0 = arith.constant 0 : i32
    %c0_i32_1 = arith.constant 0 : i32
    %c0_i32_2 = arith.constant 0 : i32
    return %c0_i32, %c0_i32_0, %c0_i32_1 : i32, i32, i32
  }
  func.func @transform_6(%arg0: i32) -> (i32, i32, i32) {
    %c0_i32 = arith.constant 0 : i32
    %c0_i32_0 = arith.constant 0 : i32
    %c0_i32_1 = arith.constant 0 : i32
    %c0_i32_2 = arith.constant 0 : i32
    return %c0_i32, %c0_i32_0, %c0_i32_1 : i32, i32, i32
  }
  func.func @transform_7(%arg0: i32) -> (i32, i32, i32) {
    %c0_i32 = arith.constant 0 : i32
    %c0_i32_0 = arith.constant 0 : i32
    %c0_i32_1 = arith.constant 0 : i32
    %c0_i32_2 = arith.constant 0 : i32
    return %c0_i32, %c0_i32_0, %c0_i32_1 : i32, i32, i32
  }
  func.func @transform_8(%arg0: i32) -> (i32, i32, i32) {
    %c0_i32 = arith.constant 0 : i32
    %c0_i32_0 = arith.constant 0 : i32
    %c0_i32_1 = arith.constant 0 : i32
    %c0_i32_2 = arith.constant 0 : i32
    return %c0_i32, %c0_i32_0, %c0_i32_1 : i32, i32, i32
  }
  func.func @transform_9(%arg0: i32) -> (i32, i32, i32) {
    %c0_i32 = arith.constant 0 : i32
    %c0_i32_0 = arith.constant 0 : i32
    %c0_i32_1 = arith.constant 0 : i32
    %c0_i32_2 = arith.constant 0 : i32
    return %c0_i32, %c0_i32_0, %c0_i32_1 : i32, i32, i32
  }
  func.func @transform_10(%arg0: i32) -> (i32, i32, i32) {
    %c0_i32 = arith.constant 0 : i32
    %c0_i32_0 = arith.constant 0 : i32
    %c0_i32_1 = arith.constant 0 : i32
    %c0_i32_2 = arith.constant 0 : i32
    return %c0_i32, %c0_i32_0, %c0_i32_1 : i32, i32, i32
  }
  func.func @transform_11(%arg0: i32) -> (i32, i32, i32) {
    %c0_i32 = arith.constant 0 : i32
    %c0_i32_0 = arith.constant 0 : i32
    %c0_i32_1 = arith.constant 0 : i32
    %c0_i32_2 = arith.constant 0 : i32
    return %c0_i32, %c0_i32_0, %c0_i32_1 : i32, i32, i32
  }
  func.func @transform_12(%arg0: i32) -> (i32, i32, i32) {
    %c0_i32 = arith.constant 0 : i32
    %c0_i32_0 = arith.constant 0 : i32
    %c0_i32_1 = arith.constant 0 : i32
    %c0_i32_2 = arith.constant 0 : i32
    return %c0_i32, %c0_i32_0, %c0_i32_1 : i32, i32, i32
  }
  func.func @transform_13(%arg0: i32) -> (i32, i32, i32) {
    %c0_i32 = arith.constant 0 : i32
    %c0_i32_0 = arith.constant 0 : i32
    %c0_i32_1 = arith.constant 0 : i32
    %c0_i32_2 = arith.constant 0 : i32
    return %c0_i32, %c0_i32_0, %c0_i32_1 : i32, i32, i32
  }
  func.func @transform_14(%arg0: i32) -> (i32, i32, i32) {
    %c0_i32 = arith.constant 0 : i32
    %c0_i32_0 = arith.constant 0 : i32
    %c0_i32_1 = arith.constant 0 : i32
    %c0_i32_2 = arith.constant 0 : i32
    return %c0_i32, %c0_i32_0, %c0_i32_1 : i32, i32, i32
  }
  func.func @transform_15(%arg0: i32) -> (i32, i32, i32) {
    %c0_i32 = arith.constant 0 : i32
    %c0_i32_0 = arith.constant 0 : i32
    %c0_i32_1 = arith.constant 0 : i32
    %c0_i32_2 = arith.constant 0 : i32
    return %c0_i32, %c0_i32_0, %c0_i32_1 : i32, i32, i32
  }
  func.func @transform_16(%arg0: i32) -> (i32, i32) {
    %c0_i32 = arith.constant 0 : i32
    %c0_i32_0 = arith.constant 0 : i32
    %c0_i32_1 = arith.constant 0 : i32
    return %c0_i32, %c0_i32_0 : i32, i32
  }
  func.func @transform_17(%arg0: i32) -> (i32, i32) {
    %c0_i32 = arith.constant 0 : i32
    %c0_i32_0 = arith.constant 0 : i32
    %c0_i32_1 = arith.constant 0 : i32
    return %c0_i32, %c0_i32_0 : i32, i32
  }
  func.func @transform_18(%arg0: i32) -> (i32, i32) {
    %c0_i32 = arith.constant 0 : i32
    %c0_i32_0 = arith.constant 0 : i32
    %c0_i32_1 = arith.constant 0 : i32
    return %c0_i32, %c0_i32_0 : i32, i32
  }
  func.func @transform_19(%arg0: i32) -> (i32, i32) {
    %c0_i32 = arith.constant 0 : i32
    %c0_i32_0 = arith.constant 0 : i32
    %c0_i32_1 = arith.constant 0 : i32
    return %c0_i32, %c0_i32_0 : i32, i32
  }
  func.func @transform_20(%arg0: i32) -> (i32, i32, i32) {
    %c0_i32 = arith.constant 0 : i32
    %c0_i32_0 = arith.constant 0 : i32
    %c0_i32_1 = arith.constant 0 : i32
    return %arg0, %c0_i32, %c0_i32_0 : i32, i32, i32
  }
}

</mosaic_0001>

<llo_original>
// kernel: bert_sentiment_forward.1
$region0: #{bert_sentiment_forward.1}
  #allocation0 [shape = 'u32[]', space=smem, size = 0x4, offset = 0x4, fixed_abs, tag = 'smem constant byte address 0x4 - core index']
  #allocation1 [shape = 'u32[144,128]{1,0:T(1,128)}', space=vmem, size = 0x12000, scoped, tag = 'internal scratch']
  %s0 = inlined_call_operand.vmem [shape: f32[2,8,32], index: 0, kind: input, shape index: {}]
  %s1 = inlined_call_operand.vmem [shape: f32[2,1,8], index: 1, kind: input, shape index: {}]
  %s2 = inlined_call_operand.vmem [shape: f32[1,32], index: 2, kind: input, shape index: {}]
  %s3 = inlined_call_operand.vmem [shape: f32[1,32], index: 3, kind: input, shape index: {}, may-alias: {3,17}]
  %s4 = inlined_call_operand.vmem [shape: bf16[2,32,96], index: 4, kind: input, shape index: {}]
  %s5 = inlined_call_operand.vmem [shape: f32[2,1,96], index: 5, kind: input, shape index: {}]
  %s6 = inlined_call_operand.vmem [shape: bf16[2,32,32], index: 6, kind: input, shape index: {}]
  %s7 = inlined_call_operand.vmem [shape: f32[2,1,32], index: 7, kind: input, shape index: {}, may-alias: {7,9,13,15}]
  %s8 = inlined_call_operand.vmem [shape: f32[2,1,32], index: 8, kind: input, shape index: {}, may-alias: {8,14}]
  %s9 = inlined_call_operand.vmem [shape: f32[2,1,32], index: 9, kind: input, shape index: {}, may-alias: {7,9,13,15}]
  %s10 = inlined_call_operand.vmem [shape: bf16[2,32,64], index: 10, kind: input, shape index: {}]
  %s11 = inlined_call_operand.vmem [shape: f32[2,1,64], index: 11, kind: input, shape index: {}]
  %s12 = inlined_call_operand.vmem [shape: bf16[2,64,32], index: 12, kind: input, shape index: {}]
  %s13 = inlined_call_operand.vmem [shape: f32[2,1,32], index: 13, kind: input, shape index: {}, may-alias: {7,9,13,15}]
  %s14 = inlined_call_operand.vmem [shape: f32[2,1,32], index: 14, kind: input, shape index: {}, may-alias: {8,14}]
  %s15 = inlined_call_operand.vmem [shape: f32[2,1,32], index: 15, kind: input, shape index: {}, may-alias: {7,9,13,15}]
  %s16 = inlined_call_operand.vmem [shape: bf16[32,32], index: 16, kind: input, shape index: {}]
  %s17 = inlined_call_operand.vmem [shape: f32[1,32], index: 17, kind: input, shape index: {}, may-alias: {3,17}]
  %s18 = inlined_call_operand.vmem [shape: bf16[32,128], index: 18, kind: input, shape index: {}]
  %s19 = inlined_call_operand.vmem [shape: f32[1,128], index: 19, kind: input, shape index: {}]
  %s20 = inlined_call_operand.hbm [shape: f32[2,1,128], index: 20, kind: output, shape index: {}]
  %s21 = sld [smem:[#allocation0]]
  $region113: #{bert_sentiment_forward.1} parent=0
    _
  %s23 = ssub.s32 1, %s21
  %s24 = scalar_select 0, %s23, %s21
  $region1: #{bert_sentiment_forward.1} parent=0
    #allocation2 [shape = 'u8[1024]{0}', space=vmem, size = 0x400, scoped, tag = 'output window, operand 0']
    #allocation3 [shape = 's32[2]{0}', space=sflag, size = 0x8, scoped, tag = 'scoped memory for bert_sentiment_forward.1']
    %25 = vsyncpa [#allocation3], 0
    %s26 = scalar_lea.sflag [#allocation3], 1
    %27 = vsyncpa %s26, 0
    loop: start=0, step=1, limit=4
    $region2: #{bert_sentiment_forward.1} parent=1 // loop_pre_header
      _
    $region3: #{bert_sentiment_forward.1} parent=1 // loop_header
      %s29 = sphi 0, %s33
      %p30 = scmp.ge.s32.totalorder %s29, 4
      %s39 = sphi 0, %s41
      %s42 = sphi 0, %s39
      %s43 = sphi 0, %s42
      %s59 = sphi 0, %s43
      %s65 = sphi 0, %s67
      %s68 = sphi 0, %s65
      %s69 = sphi 0, %s68
      %s85 = sphi 0, %s69
      %s89 = sphi 0, %s89
      %s91 = sphi 0, %s89
      %s92 = sphi 0, %s91
      %s106 = sphi 0, %s92
      %s110 = sphi 0, %s110
      %s112 = sphi 0, %s110
      %s113 = sphi 0, %s112
      %s127 = sphi 0, %s113
      %s131 = sphi 0, %s131
      %s133 = sphi 0, %s131
      %s134 = sphi 0, %s133
      %s148 = sphi 0, %s134
      %s152 = sphi 0, %s152
      %s154 = sphi 0, %s152
      %s155 = sphi 0, %s154
      %s169 = sphi 0, %s155
      %s173 = sphi 0, %s173
      %s175 = sphi 0, %s173
      %s176 = sphi 0, %s175
      %s190 = sphi 0, %s176
      %s194 = sphi 0, %s194
      %s196 = sphi 0, %s194
      %s197 = sphi 0, %s196
      %s211 = sphi 0, %s197
      %s215 = sphi 0, %s215
      %s217 = sphi 0, %s215
      %s218 = sphi 0, %s217
      %s232 = sphi 0, %s218
      %s236 = sphi 0, %s236
      %s238 = sphi 0, %s236
      %s239 = sphi 0, %s238
      %s253 = sphi 0, %s239
      %s257 = sphi 0, %s257
      %s259 = sphi 0, %s257
      %s260 = sphi 0, %s259
      %s274 = sphi 0, %s260
      %s278 = sphi 0, %s278
      %s280 = sphi 0, %s278
      %s281 = sphi 0, %s280
      %s295 = sphi 0, %s281
      %s299 = sphi 0, %s299
      %s301 = sphi 0, %s299
      %s302 = sphi 0, %s301
      %s316 = sphi 0, %s302
      %s320 = sphi 0, %s320
      %s322 = sphi 0, %s320
      %s323 = sphi 0, %s322
      %s337 = sphi 0, %s323
      %s341 = sphi 0, %s341
      %s343 = sphi 0, %s341
      %s344 = sphi 0, %s343
      %s358 = sphi 0, %s344
      %s362 = sphi 0, %s362
      %s364 = sphi 0, %s362
      %s365 = sphi 0, %s364
      %s379 = sphi 0, %s365
      %s383 = sphi 0, %s383
      %s385 = sphi 0, %s383
      %s386 = sphi 0, %s385
      %s400 = sphi 0, %s386
      %s404 = sphi 0, %s404
      %s406 = sphi 0, %s404
      %s407 = sphi 0, %s406
      %s421 = sphi 0, %s407
      %s425 = sphi 0, %s425
      %s427 = sphi 0, %s425
      %s428 = sphi 0, %s427
      %s442 = sphi 0, %s428
      %s446 = sphi 0, %s446
      %s448 = sphi 0, %s446
      %s449 = sphi 0, %s448
      %s463 = sphi 0, %s449
      %s469 = sphi 0, %s471
      %s472 = sphi 0, %s469
      %s473 = sphi 0, %s472
      %s489 = sphi 0, %s473
    $region4: #{bert_sentiment_forward.1} parent=1 // loop_header_branch
      %32 = sbr.rel (%p30) target = $region8
    $region5: #{bert_sentiment_forward.1} parent=1 // loop_body
      %s34 = ssub.s32 %s29, 1
      %s35 = ssub.s32 %s29, 2
      %s36 = sadd.s32 %s29, 1
      %s37 = ssub.s32 %s29, %s36
      %p38 = scmp.eq.s32.totalorder %s37, 0
      %s40 = sadd.s32 %s39, 1
      %s41 = scalar_select %p38, %s39, %s40
      %p44 = pneg %p38
      %p45 = scmp.eq.s32.totalorder %s29, 1
      %p46 = por %p44, %p45
      %p47 = scmp.ne.s32.totalorder %s39, %s42
      %p48 = scmp.eq.s32.totalorder %s29, 0
      %p49 = por %p47, %p48
      %p50 = scmp.ne.s32.totalorder %s39, %s42
      %p51 = scmp.eq.s32.totalorder %s34, 1
      %p52 = por %p50, %p51
      %p53 = scmp.ne.s32.totalorder %s42, %s43
      %p54 = scmp.eq.s32.totalorder %s34, 0
      %p55 = por %p53, %p54
      %p56 = scmp.ne.s32.totalorder %s42, %s43
      %p57 = scmp.eq.s32.totalorder %s35, 1
      %p58 = por %p56, %p57
      %p60 = scmp.ne.s32.totalorder %s43, %s59
      %p61 = scmp.eq.s32.totalorder %s35, 0
      %p62 = por %p60, %p61
      %s63 = ssub.s32 %s29, %s36
      %p64 = scmp.eq.s32.totalorder %s63, 0
      %s66 = sadd.s32 %s65, 1
      %s67 = scalar_select %p64, %s65, %s66
      %p70 = pneg %p64
      %p71 = scmp.eq.s32.totalorder %s29, 1
      %p72 = por %p70, %p71
      %p73 = scmp.ne.s32.totalorder %s65, %s68
      %p74 = scmp.eq.s32.totalorder %s29, 0
      %p75 = por %p73, %p74
      %p76 = scmp.ne.s32.totalorder %s65, %s68
      %p77 = scmp.eq.s32.totalorder %s34, 1
      %p78 = por %p76, %p77
      %p79 = scmp.ne.s32.totalorder %s68, %s69
      %p80 = scmp.eq.s32.totalorder %s34, 0
      %p81 = por %p79, %p80
      %p82 = scmp.ne.s32.totalorder %s68, %s69
      %p83 = scmp.eq.s32.totalorder %s35, 1
      %p84 = por %p82, %p83
      %p86 = scmp.ne.s32.totalorder %s69, %s85
      %p87 = scmp.eq.s32.totalorder %s35, 0
      %p88 = por %p86, %p87
      %s90 = sadd.s32 %s89, 1
      %p93 = scmp.eq.s32.totalorder %s29, 1
      %p94 = scmp.ne.s32.totalorder %s89, %s91
      %p95 = scmp.eq.s32.totalorder %s29, 0
      %p96 = por %p94, %p95
      %p97 = scmp.ne.s32.totalorder %s89, %s91
      %p98 = scmp.eq.s32.totalorder %s34, 1
      %p99 = por %p97, %p98
      %p100 = scmp.ne.s32.totalorder %s91, %s92
      %p101 = scmp.eq.s32.totalorder %s34, 0
      %p102 = por %p100, %p101
      %p103 = scmp.ne.s32.totalorder %s91, %s92
      %p104 = scmp.eq.s32.totalorder %s35, 1
      %p105 = por %p103, %p104
      %p107 = scmp.ne.s32.totalorder %s92, %s106
      %p108 = scmp.eq.s32.totalorder %s35, 0
      %p109 = por %p107, %p108
      %s111 = sadd.s32 %s110, 1
      %p114 = scmp.eq.s32.totalorder %s29, 1
      %p115 = scmp.ne.s32.totalorder %s110, %s112
      %p116 = scmp.eq.s32.totalorder %s29, 0
      %p117 = por %p115, %p116
      %p118 = scmp.ne.s32.totalorder %s110, %s112
      %p119 = scmp.eq.s32.totalorder %s34, 1
      %p120 = por %p118, %p119
      %p121 = scmp.ne.s32.totalorder %s112, %s113
      %p122 = scmp.eq.s32.totalorder %s34, 0
      %p123 = por %p121, %p122
      %p124 = scmp.ne.s32.totalorder %s112, %s113
      %p125 = scmp.eq.s32.totalorder %s35, 1
      %p126 = por %p124, %p125
      %p128 = scmp.ne.s32.totalorder %s113, %s127
      %p129 = scmp.eq.s32.totalorder %s35, 0
      %p130 = por %p128, %p129
      %s132 = sadd.s32 %s131, 1
      %p135 = scmp.eq.s32.totalorder %s29, 1
      %p136 = scmp.ne.s32.totalorder %s131, %s133
      %p137 = scmp.eq.s32.totalorder %s29, 0
      %p138 = por %p136, %p137
      %p139 = scmp.ne.s32.totalorder %s131, %s133
      %p140 = scmp.eq.s32.totalorder %s34, 1
      %p141 = por %p139, %p140
      %p142 = scmp.ne.s32.totalorder %s133, %s134
      %p143 = scmp.eq.s32.totalorder %s34, 0
      %p144 = por %p142, %p143
      %p145 = scmp.ne.s32.totalorder %s133, %s134
      %p146 = scmp.eq.s32.totalorder %s35, 1
      %p147 = por %p145, %p146
      %p149 = scmp.ne.s32.totalorder %s134, %s148
      %p150 = scmp.eq.s32.totalorder %s35, 0
      %p151 = por %p149, %p150
      %s153 = sadd.s32 %s152, 1
      %p156 = scmp.eq.s32.totalorder %s29, 1
      %p157 = scmp.ne.s32.totalorder %s152, %s154
      %p158 = scmp.eq.s32.totalorder %s29, 0
      %p159 = por %p157, %p158
      %p160 = scmp.ne.s32.totalorder %s152, %s154
      %p161 = scmp.eq.s32.totalorder %s34, 1
      %p162 = por %p160, %p161
      %p163 = scmp.ne.s32.totalorder %s154, %s155
      %p164 = scmp.eq.s32.totalorder %s34, 0
      %p165 = por %p163, %p164
      %p166 = scmp.ne.s32.totalorder %s154, %s155
      %p167 = scmp.eq.s32.totalorder %s35, 1
      %p168 = por %p166, %p167
      %p170 = scmp.ne.s32.totalorder %s155, %s169
      %p171 = scmp.eq.s32.totalorder %s35, 0
      %p172 = por %p170, %p171
      %s174 = sadd.s32 %s173, 1
      %p177 = scmp.eq.s32.totalorder %s29, 1
      %p178 = scmp.ne.s32.totalorder %s173, %s175
      %p179 = scmp.eq.s32.totalorder %s29, 0
      %p180 = por %p178, %p179
      %p181 = scmp.ne.s32.totalorder %s173, %s175
      %p182 = scmp.eq.s32.totalorder %s34, 1
      %p183 = por %p181, %p182
      %p184 = scmp.ne.s32.totalorder %s175, %s176
      %p185 = scmp.eq.s32.totalorder %s34, 0
      %p186 = por %p184, %p185
      %p187 = scmp.ne.s32.totalorder %s175, %s176
      %p188 = scmp.eq.s32.totalorder %s35, 1
      %p189 = por %p187, %p188
      %p191 = scmp.ne.s32.totalorder %s176, %s190
      %p192 = scmp.eq.s32.totalorder %s35, 0
      %p193 = por %p191, %p192
      %s195 = sadd.s32 %s194, 1
      %p198 = scmp.eq.s32.totalorder %s29, 1
      %p199 = scmp.ne.s32.totalorder %s194, %s196
      %p200 = scmp.eq.s32.totalorder %s29, 0
      %p201 = por %p199, %p200
      %p202 = scmp.ne.s32.totalorder %s194, %s196
      %p203 = scmp.eq.s32.totalorder %s34, 1
      %p204 = por %p202, %p203
      %p205 = scmp.ne.s32.totalorder %s196, %s197
      %p206 = scmp.eq.s32.totalorder %s34, 0
      %p207 = por %p205, %p206
      %p208 = scmp.ne.s32.totalorder %s196, %s197
      %p209 = scmp.eq.s32.totalorder %s35, 1
      %p210 = por %p208, %p209
      %p212 = scmp.ne.s32.totalorder %s197, %s211
      %p213 = scmp.eq.s32.totalorder %s35, 0
      %p214 = por %p212, %p213
      %s216 = sadd.s32 %s215, 1
      %p219 = scmp.eq.s32.totalorder %s29, 1
      %p220 = scmp.ne.s32.totalorder %s215, %s217
      %p221 = scmp.eq.s32.totalorder %s29, 0
      %p222 = por %p220, %p221
      %p223 = scmp.ne.s32.totalorder %s215, %s217
      %p224 = scmp.eq.s32.totalorder %s34, 1
      %p225 = por %p223, %p224
      %p226 = scmp.ne.s32.totalorder %s217, %s218
      %p227 = scmp.eq.s32.totalorder %s34, 0
      %p228 = por %p226, %p227
      %p229 = scmp.ne.s32.totalorder %s217, %s218
      %p230 = scmp.eq.s32.totalorder %s35, 1
      %p231 = por %p229, %p230
      %p233 = scmp.ne.s32.totalorder %s218, %s232
      %p234 = scmp.eq.s32.totalorder %s35, 0
      %p235 = por %p233, %p234
      %s237 = sadd.s32 %s236, 1
      %p240 = scmp.eq.s32.totalorder %s29, 1
      %p241 = scmp.ne.s32.totalorder %s236, %s238
      %p242 = scmp.eq.s32.totalorder %s29, 0
      %p243 = por %p241, %p242
      %p244 = scmp.ne.s32.totalorder %s236, %s238
      %p245 = scmp.eq.s32.totalorder %s34, 1
      %p246 = por %p244, %p245
      %p247 = scmp.ne.s32.totalorder %s238, %s239
      %p248 = scmp.eq.s32.totalorder %s34, 0
      %p249 = por %p247, %p248
      %p250 = scmp.ne.s32.totalorder %s238, %s239
      %p251 = scmp.eq.s32.totalorder %s35, 1
      %p252 = por %p250, %p251
      %p254 = scmp.ne.s32.totalorder %s239, %s253
      %p255 = scmp.eq.s32.totalorder %s35, 0
      %p256 = por %p254, %p255
      %s258 = sadd.s32 %s257, 1
      %p261 = scmp.eq.s32.totalorder %s29, 1
      %p262 = scmp.ne.s32.totalorder %s257, %s259
      %p263 = scmp.eq.s32.totalorder %s29, 0
      %p264 = por %p262, %p263
      %p265 = scmp.ne.s32.totalorder %s257, %s259
      %p266 = scmp.eq.s32.totalorder %s34, 1
      %p267 = por %p265, %p266
      %p268 = scmp.ne.s32.totalorder %s259, %s260
      %p269 = scmp.eq.s32.totalorder %s34, 0
      %p270 = por %p268, %p269
      %p271 = scmp.ne.s32.totalorder %s259, %s260
      %p272 = scmp.eq.s32.totalorder %s35, 1
      %p273 = por %p271, %p272
      %p275 = scmp.ne.s32.totalorder %s260, %s274
      %p276 = scmp.eq.s32.totalorder %s35, 0
      %p277 = por %p275, %p276
      %s279 = sadd.s32 %s278, 1
      %p282 = scmp.eq.s32.totalorder %s29, 1
      %p283 = scmp.ne.s32.totalorder %s278, %s280
      %p284 = scmp.eq.s32.totalorder %s29, 0
      %p285 = por %p283, %p284
      %p286 = scmp.ne.s32.totalorder %s278, %s280
      %p287 = scmp.eq.s32.totalorder %s34, 1
      %p288 = por %p286, %p287
      %p289 = scmp.ne.s32.totalorder %s280, %s281
      %p290 = scmp.eq.s32.totalorder %s34, 0
      %p291 = por %p289, %p290
      %p292 = scmp.ne.s32.totalorder %s280, %s281
      %p293 = scmp.eq.s32.totalorder %s35, 1
      %p294 = por %p292, %p293
      %p296 = scmp.ne.s32.totalorder %s281, %s295
      %p297 = scmp.eq.s32.totalorder %s35, 0
      %p298 = por %p296, %p297
      %s300 = sadd.s32 %s299, 1
      %p303 = scmp.eq.s32.totalorder %s29, 1
      %p304 = scmp.ne.s32.totalorder %s299, %s301
      %p305 = scmp.eq.s32.totalorder %s29, 0
      %p306 = por %p304, %p305
      %p307 = scmp.ne.s32.totalorder %s299, %s301
      %p308 = scmp.eq.s32.totalorder %s34, 1
      %p309 = por %p307, %p308
      %p310 = scmp.ne.s32.totalorder %s301, %s302
      %p311 = scmp.eq.s32.totalorder %s34, 0
      %p312 = por %p310, %p311
      %p313 = scmp.ne.s32.totalorder %s301, %s302
      %p314 = scmp.eq.s32.totalorder %s35, 1
      %p315 = por %p313, %p314
      %p317 = scmp.ne.s32.totalorder %s302, %s316
      %p318 = scmp.eq.s32.totalorder %s35, 0
      %p319 = por %p317, %p318
      %s321 = sadd.s32 %s320, 1
      %p324 = scmp.eq.s32.totalorder %s29, 1
      %p325 = scmp.ne.s32.totalorder %s320, %s322
      %p326 = scmp.eq.s32.totalorder %s29, 0
      %p327 = por %p325, %p326
      %p328 = scmp.ne.s32.totalorder %s320, %s322
      %p329 = scmp.eq.s32.totalorder %s34, 1
      %p330 = por %p328, %p329
      %p331 = scmp.ne.s32.totalorder %s322, %s323
      %p332 = scmp.eq.s32.totalorder %s34, 0
      %p333 = por %p331, %p332
      %p334 = scmp.ne.s32.totalorder %s322, %s323
      %p335 = scmp.eq.s32.totalorder %s35, 1
      %p336 = por %p334, %p335
      %p338 = scmp.ne.s32.totalorder %s323, %s337
      %p339 = scmp.eq.s32.totalorder %s35, 0
      %p340 = por %p338, %p339
      %s342 = sadd.s32 %s341, 1
      %p345 = scmp.eq.s32.totalorder %s29, 1
      %p346 = scmp.ne.s32.totalorder %s341, %s343
      %p347 = scmp.eq.s32.totalorder %s29, 0
      %p348 = por %p346, %p347
      %p349 = scmp.ne.s32.totalorder %s341, %s343
      %p350 = scmp.eq.s32.totalorder %s34, 1
      %p351 = por %p349, %p350
      %p352 = scmp.ne.s32.totalorder %s343, %s344
      %p353 = scmp.eq.s32.totalorder %s34, 0
      %p354 = por %p352, %p353
      %p355 = scmp.ne.s32.totalorder %s343, %s344
      %p356 = scmp.eq.s32.totalorder %s35, 1
      %p357 = por %p355, %p356
      %p359 = scmp.ne.s32.totalorder %s344, %s358
      %p360 = scmp.eq.s32.totalorder %s35, 0
      %p361 = por %p359, %p360
      %s363 = sadd.s32 %s362, 1
      %p366 = scmp.eq.s32.totalorder %s29, 1
      %p367 = scmp.ne.s32.totalorder %s362, %s364
      %p368 = scmp.eq.s32.totalorder %s29, 0
      %p369 = por %p367, %p368
      %p370 = scmp.ne.s32.totalorder %s362, %s364
      %p371 = scmp.eq.s32.totalorder %s34, 1
      %p372 = por %p370, %p371
      %p373 = scmp.ne.s32.totalorder %s364, %s365
      %p374 = scmp.eq.s32.totalorder %s34, 0
      %p375 = por %p373, %p374
      %p376 = scmp.ne.s32.totalorder %s364, %s365
      %p377 = scmp.eq.s32.totalorder %s35, 1
      %p378 = por %p376, %p377
      %p380 = scmp.ne.s32.totalorder %s365, %s379
      %p381 = scmp.eq.s32.totalorder %s35, 0
      %p382 = por %p380, %p381
      %s384 = sadd.s32 %s383, 1
      %p387 = scmp.eq.s32.totalorder %s29, 1
      %p388 = scmp.ne.s32.totalorder %s383, %s385
      %p389 = scmp.eq.s32.totalorder %s29, 0
      %p390 = por %p388, %p389
      %p391 = scmp.ne.s32.totalorder %s383, %s385
      %p392 = scmp.eq.s32.totalorder %s34, 1
      %p393 = por %p391, %p392
      %p394 = scmp.ne.s32.totalorder %s385, %s386
      %p395 = scmp.eq.s32.totalorder %s34, 0
      %p396 = por %p394, %p395
      %p397 = scmp.ne.s32.totalorder %s385, %s386
      %p398 = scmp.eq.s32.totalorder %s35, 1
      %p399 = por %p397, %p398
      %p401 = scmp.ne.s32.totalorder %s386, %s400
      %p402 = scmp.eq.s32.totalorder %s35, 0
      %p403 = por %p401, %p402
      %s405 = sadd.s32 %s404, 1
      %p408 = scmp.eq.s32.totalorder %s29, 1
      %p409 = scmp.ne.s32.totalorder %s404, %s406
      %p410 = scmp.eq.s32.totalorder %s29, 0
      %p411 = por %p409, %p410
      %p412 = scmp.ne.s32.totalorder %s404, %s406
      %p413 = scmp.eq.s32.totalorder %s34, 1
      %p414 = por %p412, %p413
      %p415 = scmp.ne.s32.totalorder %s406, %s407
      %p416 = scmp.eq.s32.totalorder %s34, 0
      %p417 = por %p415, %p416
      %p418 = scmp.ne.s32.totalorder %s406, %s407
      %p419 = scmp.eq.s32.totalorder %s35, 1
      %p420 = por %p418, %p419
      %p422 = scmp.ne.s32.totalorder %s407, %s421
      %p423 = scmp.eq.s32.totalorder %s35, 0
      %p424 = por %p422, %p423
      %s426 = sadd.s32 %s425, 1
      %p429 = scmp.eq.s32.totalorder %s29, 1
      %p430 = scmp.ne.s32.totalorder %s425, %s427
      %p431 = scmp.eq.s32.totalorder %s29, 0
      %p432 = por %p430, %p431
      %p433 = scmp.ne.s32.totalorder %s425, %s427
      %p434 = scmp.eq.s32.totalorder %s34, 1
      %p435 = por %p433, %p434
      %p436 = scmp.ne.s32.totalorder %s427, %s428
      %p437 = scmp.eq.s32.totalorder %s34, 0
      %p438 = por %p436, %p437
      %p439 = scmp.ne.s32.totalorder %s427, %s428
      %p440 = scmp.eq.s32.totalorder %s35, 1
      %p441 = por %p439, %p440
      %p443 = scmp.ne.s32.totalorder %s428, %s442
      %p444 = scmp.eq.s32.totalorder %s35, 0
      %p445 = por %p443, %p444
      %s447 = sadd.s32 %s446, 1
      %p450 = scmp.eq.s32.totalorder %s29, 1
      %p451 = scmp.ne.s32.totalorder %s446, %s448
      %p452 = scmp.eq.s32.totalorder %s29, 0
      %p453 = por %p451, %p452
      %p454 = scmp.ne.s32.totalorder %s446, %s448
      %p455 = scmp.eq.s32.totalorder %s34, 1
      %p456 = por %p454, %p455
      %p457 = scmp.ne.s32.totalorder %s448, %s449
      %p458 = scmp.eq.s32.totalorder %s34, 0
      %p459 = por %p457, %p458
      %p460 = scmp.ne.s32.totalorder %s448, %s449
      %p461 = scmp.eq.s32.totalorder %s35, 1
      %p462 = por %p460, %p461
      %p464 = scmp.ne.s32.totalorder %s449, %s463
      %p465 = scmp.eq.s32.totalorder %s35, 0
      %p466 = por %p464, %p465
      %s467 = ssub.s32 %s29, %s36
      %p468 = scmp.eq.s32.totalorder %s467, 0
      %s470 = sadd.s32 %s469, 1
      %s471 = scalar_select %p468, %s469, %s470
      %p474 = pneg %p468
      %p475 = scmp.eq.s32.totalorder %s29, 1
      %p476 = por %p474, %p475
      %p477 = scmp.ne.s32.totalorder %s469, %s472
      %p478 = scmp.eq.s32.totalorder %s29, 0
      %p479 = por %p477, %p478
      %p480 = scmp.ne.s32.totalorder %s469, %s472
      %p481 = scmp.eq.s32.totalorder %s34, 1
      %p482 = por %p480, %p481
      %p483 = scmp.ne.s32.totalorder %s472, %s473
      %p484 = scmp.eq.s32.totalorder %s34, 0
      %p485 = por %p483, %p484
      %p486 = scmp.ne.s32.totalorder %s472, %s473
      %p487 = scmp.eq.s32.totalorder %s35, 1
      %p488 = por %p486, %p487
      %p490 = scmp.ne.s32.totalorder %s473, %s489
      %p491 = scmp.eq.s32.totalorder %s35, 0
      %p492 = por %p490, %p491
      %p493 = scmp.le.s32.totalorder 1, %s29
      %p494 = scmp.lt.s32.totalorder %s29, 3
      %p495 = pnand %p493, %p494
      %p496 = pneg %p495
      // Predicated region
      $region9: #{bert_sentiment_forward.1} parent=5 // pred_check
        _
      $region10: #{bert_sentiment_forward.1} parent=5 // pred_check_branch
        %498 = sbr.rel (%p495) target = $region12
      $region11: #{bert_sentiment_forward.1} parent=5 // pred_region
        %s499 = ssub.s32 %s29, 1
        // Predicated region
        $region13: #{bert_sentiment_forward.1} parent=11 // pred_check
          %p500 = pneg %p102
        $region14: #{bert_sentiment_forward.1} parent=11 // pred_check_branch
          %502 = sbr.rel (%p500) target = $region16
        $region15: #{bert_sentiment_forward.1} parent=11 // pred_region
          _
        $region16: #{bert_sentiment_forward.1} parent=11 // pred_fallthru
          _
        // Predicated region
        $region17: #{bert_sentiment_forward.1} parent=11 // pred_check
          %p503 = pneg %p123
        $region18: #{bert_sentiment_forward.1} parent=11 // pred_check_branch
          %505 = sbr.rel (%p503) target = $region20
        $region19: #{bert_sentiment_forward.1} parent=11 // pred_region
          _
        $region20: #{bert_sentiment_forward.1} parent=11 // pred_fallthru
          _
        // Predicated region
        $region21: #{bert_sentiment_forward.1} parent=11 // pred_check
          %p506 = pneg %p144
        $region22: #{bert_sentiment_forward.1} parent=11 // pred_check_branch
          %508 = sbr.rel (%p506) target = $region24
        $region23: #{bert_sentiment_forward.1} parent=11 // pred_region
          _
        $region24: #{bert_sentiment_forward.1} parent=11 // pred_fallthru
          _
        // Predicated region
        $region25: #{bert_sentiment_forward.1} parent=11 // pred_check
          %p509 = pneg %p165
        $region26: #{bert_sentiment_forward.1} parent=11 // pred_check_branch
          %511 = sbr.rel (%p509) target = $region28
        $region27: #{bert_sentiment_forward.1} parent=11 // pred_region
          _
        $region28: #{bert_sentiment_forward.1} parent=11 // pred_fallthru
          _
        // Predicated region
        $region29: #{bert_sentiment_forward.1} parent=11 // pred_check
          %p512 = pneg %p186
        $region30: #{bert_sentiment_forward.1} parent=11 // pred_check_branch
          %514 = sbr.rel (%p512) target = $region32
        $region31: #{bert_sentiment_forward.1} parent=11 // pred_region
          _
        $region32: #{bert_sentiment_forward.1} parent=11 // pred_fallthru
          _
        // Predicated region
        $region33: #{bert_sentiment_forward.1} parent=11 // pred_check
          %p515 = pneg %p207
        $region34: #{bert_sentiment_forward.1} parent=11 // pred_check_branch
          %517 = sbr.rel (%p515) target = $region36
        $region35: #{bert_sentiment_forward.1} parent=11 // pred_region
          _
        $region36: #{bert_sentiment_forward.1} parent=11 // pred_fallthru
          _
        // Predicated region
        $region37: #{bert_sentiment_forward.1} parent=11 // pred_check
          %p518 = pneg %p228
        $region38: #{bert_sentiment_forward.1} parent=11 // pred_check_branch
          %520 = sbr.rel (%p518) target = $region40
        $region39: #{bert_sentiment_forward.1} parent=11 // pred_region
          _
        $region40: #{bert_sentiment_forward.1} parent=11 // pred_fallthru
          _
        // Predicated region
        $region41: #{bert_sentiment_forward.1} parent=11 // pred_check
          %p521 = pneg %p249
        $region42: #{bert_sentiment_forward.1} parent=11 // pred_check_branch
          %523 = sbr.rel (%p521) target = $region44
        $region43: #{bert_sentiment_forward.1} parent=11 // pred_region
          _
        $region44: #{bert_sentiment_forward.1} parent=11 // pred_fallthru
          _
        // Predicated region
        $region45: #{bert_sentiment_forward.1} parent=11 // pred_check
          %p524 = pneg %p270
        $region46: #{bert_sentiment_forward.1} parent=11 // pred_check_branch
          %526 = sbr.rel (%p524) target = $region48
        $region47: #{bert_sentiment_forward.1} parent=11 // pred_region
          _
        $region48: #{bert_sentiment_forward.1} parent=11 // pred_fallthru
          _
        // Predicated region
        $region49: #{bert_sentiment_forward.1} parent=11 // pred_check
          %p527 = pneg %p291
        $region50: #{bert_sentiment_forward.1} parent=11 // pred_check_branch
          %529 = sbr.rel (%p527) target = $region52
        $region51: #{bert_sentiment_forward.1} parent=11 // pred_region
          _
        $region52: #{bert_sentiment_forward.1} parent=11 // pred_fallthru
          _
        // Predicated region
        $region53: #{bert_sentiment_forward.1} parent=11 // pred_check
          %p530 = pneg %p312
        $region54: #{bert_sentiment_forward.1} parent=11 // pred_check_branch
          %532 = sbr.rel (%p530) target = $region56
        $region55: #{bert_sentiment_forward.1} parent=11 // pred_region
          _
        $region56: #{bert_sentiment_forward.1} parent=11 // pred_fallthru
          _
        // Predicated region
        $region57: #{bert_sentiment_forward.1} parent=11 // pred_check
          %p533 = pneg %p333
        $region58: #{bert_sentiment_forward.1} parent=11 // pred_check_branch
          %535 = sbr.rel (%p533) target = $region60
        $region59: #{bert_sentiment_forward.1} parent=11 // pred_region
          _
        $region60: #{bert_sentiment_forward.1} parent=11 // pred_fallthru
          _
        // Predicated region
        $region61: #{bert_sentiment_forward.1} parent=11 // pred_check
          %p536 = pneg %p354
        $region62: #{bert_sentiment_forward.1} parent=11 // pred_check_branch
          %538 = sbr.rel (%p536) target = $region64
        $region63: #{bert_sentiment_forward.1} parent=11 // pred_region
          _
        $region64: #{bert_sentiment_forward.1} parent=11 // pred_fallthru
          _
        // Predicated region
        $region65: #{bert_sentiment_forward.1} parent=11 // pred_check
          %p539 = pneg %p375
        $region66: #{bert_sentiment_forward.1} parent=11 // pred_check_branch
          %541 = sbr.rel (%p539) target = $region68
        $region67: #{bert_sentiment_forward.1} parent=11 // pred_region
          _
        $region68: #{bert_sentiment_forward.1} parent=11 // pred_fallthru
          _
        // Predicated region
        $region69: #{bert_sentiment_forward.1} parent=11 // pred_check
          %p542 = pneg %p396
        $region70: #{bert_sentiment_forward.1} parent=11 // pred_check_branch
          %544 = sbr.rel (%p542) target = $region72
        $region71: #{bert_sentiment_forward.1} parent=11 // pred_region
          _
        $region72: #{bert_sentiment_forward.1} parent=11 // pred_fallthru
          _
        // Predicated region
        $region73: #{bert_sentiment_forward.1} parent=11 // pred_check
          %p545 = pneg %p417
        $region74: #{bert_sentiment_forward.1} parent=11 // pred_check_branch
          %547 = sbr.rel (%p545) target = $region76
        $region75: #{bert_sentiment_forward.1} parent=11 // pred_region
          _
        $region76: #{bert_sentiment_forward.1} parent=11 // pred_fallthru
          _
        // Predicated region
        $region77: #{bert_sentiment_forward.1} parent=11 // pred_check
          %p548 = pneg %p438
        $region78: #{bert_sentiment_forward.1} parent=11 // pred_check_branch
          %550 = sbr.rel (%p548) target = $region80
        $region79: #{bert_sentiment_forward.1} parent=11 // pred_region
          _
        $region80: #{bert_sentiment_forward.1} parent=11 // pred_fallthru
          _
        // Predicated region
        $region81: #{bert_sentiment_forward.1} parent=11 // pred_check
          %p551 = pneg %p459
        $region82: #{bert_sentiment_forward.1} parent=11 // pred_check_branch
          %553 = sbr.rel (%p551) target = $region84
        $region83: #{bert_sentiment_forward.1} parent=11 // pred_region
          _
        $region84: #{bert_sentiment_forward.1} parent=11 // pred_fallthru
          _
      $region12: #{bert_sentiment_forward.1} parent=5 // pred_fallthru
        _
      %p554 = scmp.lt.s32.totalorder %s29, 2
      // Predicated region
      $region85: #{bert_sentiment_forward.1} parent=5 // pred_check
        %p555 = pneg %p554
      $region86: #{bert_sentiment_forward.1} parent=5 // pred_check_branch
        %557 = sbr.rel (%p555) target = $region88
      $region87: #{bert_sentiment_forward.1} parent=5 // pred_region
        // Predicated region
        $region89: #{bert_sentiment_forward.1} parent=87 // pred_check
          %p558 = pneg %p49
        $region90: #{bert_sentiment_forward.1} parent=87 // pred_check_branch
          %560 = sbr.rel (%p558) target = $region92
        $region91: #{bert_sentiment_forward.1} parent=87 // pred_region
          %p561 = scmp.lt.s32.totalorder %s29, 1
          %s562 = scalar_select %p561, %s29, 1
          %s563 = smul.addr %s562, 8
          %s564 = scalar_lea.vmem %s0, %s563
        $region92: #{bert_sentiment_forward.1} parent=87 // pred_fallthru
          _
        // Predicated region
        $region93: #{bert_sentiment_forward.1} parent=87 // pred_check
          %p565 = pneg %p75
        $region94: #{bert_sentiment_forward.1} parent=87 // pred_check_branch
          %567 = sbr.rel (%p565) target = $region96
        $region95: #{bert_sentiment_forward.1} parent=87 // pred_region
          %p568 = scmp.lt.s32.totalorder %s29, 1
          %s569 = scalar_select %p568, %s29, 1
          %s570 = scalar_lea.vmem %s1, %s569
        $region96: #{bert_sentiment_forward.1} parent=87 // pred_fallthru
          _
      $region88: #{bert_sentiment_forward.1} parent=5 // pred_fallthru
        _
      %p571 = scmp.le.s32.totalorder 1, %s29
      %p572 = scmp.lt.s32.totalorder %s29, 3
      %p573 = pnand %p571, %p572
      %p574 = pneg %p573
      // Predicated region
      $region97: #{bert_sentiment_forward.1} parent=5 // pred_check
        _
      $region98: #{bert_sentiment_forward.1} parent=5 // pred_check_branch
        %576 = sbr.rel (%p573) target = $region100
      $region99: #{bert_sentiment_forward.1} parent=5 // pred_region
        %s577 = ssub.s32 %s29, 1
        %p578 = scmp.lt.s32.totalorder %s34, 1
        %s579 = scalar_select %p578, %s34, 1
        %s580 = smul.addr %s579, 8
        %s581 = scalar_lea.vmem %s0, %s580
        %p582 = pneg %p55
        %p583 = pneg %p52
        %p584 = scmp.lt.s32.totalorder %s34, 1
        %s585 = scalar_select %p584, %s34, 1
        %s586 = scalar_lea.vmem %s1, %s585
        %p587 = pneg %p81
        %p588 = pneg %p78
        %p589 = pneg %p102
        %p590 = pneg %p99
        %p591 = pneg %p123
        %p592 = pneg %p120
        %p593 = pneg %p144
        %p594 = pneg %p141
        %p595 = pneg %p165
        %p596 = pneg %p162
        %p597 = pneg %p186
        %p598 = pneg %p183
        %p599 = pneg %p207
        %p600 = pneg %p204
        %p601 = pneg %p228
        %p602 = pneg %p225
        %p603 = pneg %p249
        %p604 = pneg %p246
        %p605 = pneg %p270
        %p606 = pneg %p267
        %p607 = pneg %p291
        %p608 = pneg %p288
        %p609 = pneg %p312
        %p610 = pneg %p309
        %p611 = pneg %p333
        %p612 = pneg %p330
        %p613 = pneg %p354
        %p614 = pneg %p351
        %p615 = pneg %p375
        %p616 = pneg %p372
        %p617 = pneg %p396
        %p618 = pneg %p393
        %p619 = pneg %p417
        %p620 = pneg %p414
        %p621 = pneg %p438
        %p622 = pneg %p435
        %p623 = pneg %p459
        %p624 = pneg %p456
        %p625 = pneg %p485
        %p626 = pneg %p482
        %s627 = sand.u32 %s472, 1
        %s628 = scalar_lea.sflag [#allocation3], %s627
        %s629 = sand.u32 %s472, 1
        %s630 = scalar_lea.vmem [#allocation2], %s629
        %p631 = scmp.lt.s32.totalorder %s34, 1
        %s632 = scalar_select %p631, %s34, 1
        %s633 = smul.addr %s632, 8
        %s634 = scalar_lea.vmem %s0, %s633
        %p635 = scmp.lt.s32.totalorder %s34, 1
        %s636 = scalar_select %p635, %s34, 1
        %s637 = scalar_lea.vmem %s1, %s636
        %v639 = vld [vmem:[%s634] sm:$0xff]
        %v640 = vld [vmem:[%s2] sm:$0x1]
        %v641 = vld [vmem:[%s3] sm:$0x1]
        %vm642 = vcmask 261120
        %v643 = vsel %vm642, %v639, 0.0
        %644 = vadd.xlane.f32.xlu0 %v643
        %v645 = vpop.xlane.xlu0 %644
        %v646 = vrcp.pop 32.0
        %v647 = vmul.f32 %v645, %v646
        %v648 = vsub.f32 %v639, %v647
        %v649 = vmul.f32 %v648, %v648
        %v650 = vsel %vm642, %v649, 0.0
        %651 = vadd.xlane.f32.xlu0 %v650
        %v652 = vpop.xlane.xlu0 %651
        %v653 = vmul.f32 %v652, %v646
        %v654 = vadd.f32 %v653, 1e-12
        %v655 = vrsqrt.pop %v654
        %v656 = vmul.f32 %v648, %v655
        %v658 = vlaneseq
        %v659 = vshrl.u32 %v658, 7
        %v660 = vsub.s32 0, %v659
        %v661 = vrot.slane %v640, %v660
        %v663 = vmul.f32 %v656, %v661
        %v665 = vlaneseq
        %v666 = vshrl.u32 %v665, 7
        %v667 = vsub.s32 0, %v666
        %v668 = vrot.slane %v641, %v667
        %v670 = vadd.f32 %v663, %v668
        %v671 = vld [vmem:[%s637] sm:$0x1]
        %v672 = vpack.c.bf16 %v670, %v670
        %v673 = vld [vmem:[%s4] sm:$0xf]
        %v674 = vld [vmem:[%s4 + $0x4] sm:$0xf]
        %v675 = vld [vmem:[%s4 + $0x8] sm:$0xf]
        %v676 = vld [vmem:[%s4 + $0xc] sm:$0xf]
        %v677 = vld [vmem:[%s5] sm:$0x1]
        %v679 = vlaneseq
        %v680 = vshrl.u32 %v679, 7
        %v681 = vsub.s32 0, %v680
        %v682 = vrot.slane %v677, %v681
        %v688 = vunpack.c.l.b16 %v673
        %v689 = vunpack.c.l.b16 %v674
        %v690 = vunpack.c.l.b16 %v675
        %v691 = vunpack.c.l.b16 %v676
        %v692 = vpack.c.b16 %v689, %v688
        %v693 = vpack.c.b16 %v691, %v690
        %v697 = vsel %vm642, %v672, 0
        %699 = vmatprep.subr.bf16.mxu0 0
        %700 = vmatpush1.bf16.msra.mxu0 0
        %701 = vmatprep.subr.bf16.mxu0 0
        %702 = vmatpush1.bf16.msra.mxu0 0
        %703 = vmatprep.subr.bf16.mxu0 0
        %704 = vmatpush1.bf16.msra.mxu0 0
        %705 = vmatprep.subr.bf16.mxu0 0
        %706 = vmatpush1.bf16.msra.mxu0 0
        %707 = vmatprep.subr.bf16.mxu0 0
        %708 = vmatpush1.bf16.msra.mxu0 0
        %709 = vmatprep.subr.bf16.mxu0 0
        %710 = vmatpush1.bf16.msra.mxu0 0
        %711 = vmatprep.subr.bf16.mxu0 0
        %712 = vmatpush1.bf16.msra.mxu0 %v693
        %713 = vmatprep.subr.bf16.mxu0 0
        %714 = vmatpush1.bf16.msra.mxu0 %v692
        %715 = vmatprep.subr.bf16.mxu0 0
        %716 = vmatpush2.bf16.msra.mxu0 0
        %717 = vmatprep.subr.bf16.mxu0 0
        %718 = vmatpush2.bf16.msra.mxu0 0
        %719 = vmatprep.subr.bf16.mxu0 0
        %720 = vmatpush2.bf16.msra.mxu0 0
        %721 = vmatprep.subr.bf16.mxu0 0
        %722 = vmatpush2.bf16.msra.mxu0 0
        %723 = vmatprep.subr.bf16.mxu0 0
        %724 = vmatpush2.bf16.msra.mxu0 0
        %725 = vmatprep.subr.bf16.mxu0 0
        %726 = vmatpush2.bf16.msra.mxu0 0
        %727 = vmatprep.subr.bf16.mxu0 0
        %728 = vmatpush2.bf16.msra.mxu0 0
        %729 = vmatprep.subr.bf16.mxu0 0
        %730 = vmatpush2.bf16.msra.mxu0 0
        %731 = vmatprep.mubr.bf16.mxu0 0
        %732 = vmatmul.mubr.bf16.gmra.mxu0 %v697
        %v733 = vpop.f32.mrf.mxu0
        %v734 = vadd.f32 %v682, %v733
        %v735 = vpop.f32.mrf.mxu0
        %v736 = vpop.f32.mrf.mxu0
        %v737 = vpop.f32.mrf.mxu0
        %738 = vdwg.mxu0
        %740 = vrot.lane.b32.xlu0 %v734, 96
        %v741 = vpop.permute.xlu0 %740
        %vm742 = vcmask 130048
        %v743 = vsel %vm742, %v734, 0
        %v745 = vsel %vm742, %v741, 0
        %747 = vmatprep.subr.mxu0 0.0
        %748 = vmatpush1.xpose.msra.mxu0 0.0
        %749 = vmatprep.subr.mxu0 0.0
        %750 = vmatpush1.xpose.msra.mxu0 0.0
        %751 = vmatprep.subr.mxu0 0.0
        %752 = vmatpush1.xpose.msra.mxu0 0.0
        %753 = vmatprep.subr.mxu0 0.0
        %754 = vmatpush1.xpose.msra.mxu0 0.0
        %755 = vmatprep.subr.mxu0 0.0
        %756 = vmatpush1.xpose.msra.mxu0 0.0
        %757 = vmatprep.subr.mxu0 0.0
        %758 = vmatpush1.xpose.msra.mxu0 0.0
        %759 = vmatprep.subr.mxu0 0.0
        %760 = vmatpush1.xpose.msra.mxu0 0.0
        %761 = vmatprep.subr.mxu0 0.0
        %762 = vmatpush1.xpose.msra.mxu0 0.0
        %763 = vmatprep.subr.mxu0 0.0
        %764 = vmatpush1.xpose.msra.mxu0 0.0
        %765 = vmatprep.subr.mxu0 0.0
        %766 = vmatpush1.xpose.msra.mxu0 0.0
        %767 = vmatprep.subr.mxu0 0.0
        %768 = vmatpush1.xpose.msra.mxu0 0.0
        %769 = vmatprep.subr.mxu0 0.0
        %770 = vmatpush1.xpose.msra.mxu0 0.0
        %771 = vmatprep.subr.mxu0 0.0
        %772 = vmatpush1.xpose.msra.mxu0 0.0
        %773 = vmatprep.subr.mxu0 0.0
        %774 = vmatpush1.xpose.msra.mxu0 0.0
        %775 = vmatprep.subr.mxu0 0.0
        %776 = vmatpush1.xpose.msra.mxu0 0.0
        %777 = vmatprep.subr.mxu0 0.0
        %778 = vmatpush1.xpose.msra.mxu0 %v745
        %779 = vmatprep.subr.mxu0 0.0
        %780 = vmatpush2.xpose.msra.mxu0 0.0
        %781 = vmatprep.subr.mxu0 0.0
        %782 = vmatpush2.xpose.msra.mxu0 0.0
        %783 = vmatprep.subr.mxu0 0.0
        %784 = vmatpush2.xpose.msra.mxu0 0.0
        %785 = vmatprep.subr.mxu0 0.0
        %786 = vmatpush2.xpose.msra.mxu0 0.0
        %787 = vmatprep.subr.mxu0 0.0
        %788 = vmatpush2.xpose.msra.mxu0 0.0
        %789 = vmatprep.subr.mxu0 0.0
        %790 = vmatpush2.xpose.msra.mxu0 0.0
        %791 = vmatprep.subr.mxu0 0.0
        %792 = vmatpush2.xpose.msra.mxu0 0.0
        %793 = vmatprep.subr.mxu0 0.0
        %794 = vmatpush2.xpose.msra.mxu0 0.0
        %795 = vmatprep.subr.mxu0 0.0
        %796 = vmatpush2.xpose.msra.mxu0 0.0
        %797 = vmatprep.subr.mxu0 0.0
        %798 = vmatpush2.xpose.msra.mxu0 0.0
        %799 = vmatprep.subr.mxu0 0.0
        %800 = vmatpush2.xpose.msra.mxu0 0.0
        %801 = vmatprep.subr.mxu0 0.0
        %802 = vmatpush2.xpose.msra.mxu0 0.0
        %803 = vmatprep.subr.mxu0 0.0
        %804 = vmatpush2.xpose.msra.mxu0 0.0
        %805 = vmatprep.subr.mxu0 0.0
        %806 = vmatpush2.xpose.msra.mxu0 0.0
        %807 = vmatprep.subr.mxu0 0.0
        %808 = vmatpush2.xpose.msra.mxu0 0.0
        %809 = vmatprep.subr.mxu0 0.0
        %810 = vmatpush2.xpose.msra.mxu0 0.0
        %811 = vmatprep.mubr.f32.mxu0 0.0
        %812 = vmatmul.mubr.f32.gmra.mxu0 %v743
        %v813 = vpop.f32.mrf.mxu0
        %v814 = vadd.f32 0.0, %v813
        %v815 = vpop.f32.mrf.mxu0
        %816 = vdwg.mxu0
        %v817 = vmul.f32 %v814, 0.25
        %v819 = vlaneseq
        %v820 = vshrl.u32 %v819, 7
        %v821 = vsub.s32 0, %v820
        %v822 = vrot.slane %v671, %v821
        %v824 = vadd.f32 %v817, %v822
        %vm825 = vcmask 64512
        %v826 = vsel %vm825, %v824, -inf
        %827 = vmax.xlane.f32.xlu0 %v826
        %v828 = vpop.xlane.xlu0 %827
        %v829 = vsub.f32 %v824, %v828
        %v830 = vmul.f32 %v829, 1.442695
        %v831 = vpow.pop %v830
        %v832 = vsel %vm825, %v831, 0.0
        %833 = vadd.xlane.f32.xlu0 %v832
        %v834 = vpop.xlane.xlu0 %833
        %v835 = vrcp.pop %v834
        %v836 = vmul.f32 %v831, %v835
        %837 = vrot.lane.b32.xlu0 %v734, 64
        %v838 = vpop.permute.xlu0 %837
        %v841 = vsel %vm825, %v836, 0
        %843 = vmatprep.subr.mxu0 0.0
        %844 = vmatpush1.msra.mxu0 0.0
        %845 = vmatprep.subr.mxu0 0.0
        %846 = vmatpush1.msra.mxu0 0.0
        %847 = vmatprep.subr.mxu0 0.0
        %848 = vmatpush1.msra.mxu0 0.0
        %849 = vmatprep.subr.mxu0 0.0
        %850 = vmatpush1.msra.mxu0 0.0
        %851 = vmatprep.subr.mxu0 0.0
        %852 = vmatpush1.msra.mxu0 0.0
        %853 = vmatprep.subr.mxu0 0.0
        %854 = vmatpush1.msra.mxu0 0.0
        %855 = vmatprep.subr.mxu0 0.0
        %856 = vmatpush1.msra.mxu0 0.0
        %857 = vmatprep.subr.mxu0 0.0
        %858 = vmatpush1.msra.mxu0 0.0
        %859 = vmatprep.subr.mxu0 0.0
        %860 = vmatpush1.msra.mxu0 0.0
        %861 = vmatprep.subr.mxu0 0.0
        %862 = vmatpush1.msra.mxu0 0.0
        %863 = vmatprep.subr.mxu0 0.0
        %864 = vmatpush1.msra.mxu0 0.0
        %865 = vmatprep.subr.mxu0 0.0
        %866 = vmatpush1.msra.mxu0 0.0
        %867 = vmatprep.subr.mxu0 0.0
        %868 = vmatpush1.msra.mxu0 0.0
        %869 = vmatprep.subr.mxu0 0.0
        %870 = vmatpush1.msra.mxu0 0.0
        %871 = vmatprep.subr.mxu0 0.0
        %872 = vmatpush1.msra.mxu0 0.0
        %873 = vmatprep.subr.mxu0 0.0
        %874 = vmatpush1.msra.mxu0 %v838
        %875 = vmatprep.subr.mxu0 0.0
        %876 = vmatpush2.msra.mxu0 0.0
        %877 = vmatprep.subr.mxu0 0.0
        %878 = vmatpush2.msra.mxu0 0.0
        %879 = vmatprep.subr.mxu0 0.0
        %880 = vmatpush2.msra.mxu0 0.0
        %881 = vmatprep.subr.mxu0 0.0
        %882 = vmatpush2.msra.mxu0 0.0
        %883 = vmatprep.subr.mxu0 0.0
        %884 = vmatpush2.msra.mxu0 0.0
        %885 = vmatprep.subr.mxu0 0.0
        %886 = vmatpush2.msra.mxu0 0.0
        %887 = vmatprep.subr.mxu0 0.0
        %888 = vmatpush2.msra.mxu0 0.0
        %889 = vmatprep.subr.mxu0 0.0
        %890 = vmatpush2.msra.mxu0 0.0
        %891 = vmatprep.subr.mxu0 0.0
        %892 = vmatpush2.msra.mxu0 0.0
        %893 = vmatprep.subr.mxu0 0.0
        %894 = vmatpush2.msra.mxu0 0.0
        %895 = vmatprep.subr.mxu0 0.0
        %896 = vmatpush2.msra.mxu0 0.0
        %897 = vmatprep.subr.mxu0 0.0
        %898 = vmatpush2.msra.mxu0 0.0
        %899 = vmatprep.subr.mxu0 0.0
        %900 = vmatpush2.msra.mxu0 0.0
        %901 = vmatprep.subr.mxu0 0.0
        %902 = vmatpush2.msra.mxu0 0.0
        %903 = vmatprep.subr.mxu0 0.0
        %904 = vmatpush2.msra.mxu0 0.0
        %905 = vmatprep.subr.mxu0 0.0
        %906 = vmatpush2.msra.mxu0 0.0
        %907 = vmatprep.mubr.f32.mxu0 0.0
        %908 = vmatmul.mubr.f32.gmra.mxu0 %v841
        %v909 = vpop.f32.mrf.mxu0
        %v910 = vadd.f32 0.0, %v909
        %v911 = vpop.f32.mrf.mxu0
        %912 = vdwg.mxu0
        %913 = vrot.lane.b32.xlu0 %v734, 112
        %v914 = vpop.permute.xlu0 %913
        %915 = vrot.lane.b32.xlu0 %v734, 80
        %v916 = vpop.permute.xlu0 %915
        %v917 = vsel %vm742, %v914, 0
        %v919 = vsel %vm742, %v916, 0
        %921 = vmatprep.subr.mxu0 0.0
        %922 = vmatpush1.xpose.msra.mxu0 0.0
        %923 = vmatprep.subr.mxu0 0.0
        %924 = vmatpush1.xpose.msra.mxu0 0.0
        %925 = vmatprep.subr.mxu0 0.0
        %926 = vmatpush1.xpose.msra.mxu0 0.0
        %927 = vmatprep.subr.mxu0 0.0
        %928 = vmatpush1.xpose.msra.mxu0 0.0
        %929 = vmatprep.subr.mxu0 0.0
        %930 = vmatpush1.xpose.msra.mxu0 0.0
        %931 = vmatprep.subr.mxu0 0.0
        %932 = vmatpush1.xpose.msra.mxu0 0.0
        %933 = vmatprep.subr.mxu0 0.0
        %934 = vmatpush1.xpose.msra.mxu0 0.0
        %935 = vmatprep.subr.mxu0 0.0
        %936 = vmatpush1.xpose.msra.mxu0 0.0
        %937 = vmatprep.subr.mxu0 0.0
        %938 = vmatpush1.xpose.msra.mxu0 0.0
        %939 = vmatprep.subr.mxu0 0.0
        %940 = vmatpush1.xpose.msra.mxu0 0.0
        %941 = vmatprep.subr.mxu0 0.0
        %942 = vmatpush1.xpose.msra.mxu0 0.0
        %943 = vmatprep.subr.mxu0 0.0
        %944 = vmatpush1.xpose.msra.mxu0 0.0
        %945 = vmatprep.subr.mxu0 0.0
        %946 = vmatpush1.xpose.msra.mxu0 0.0
        %947 = vmatprep.subr.mxu0 0.0
        %948 = vmatpush1.xpose.msra.mxu0 0.0
        %949 = vmatprep.subr.mxu0 0.0
        %950 = vmatpush1.xpose.msra.mxu0 0.0
        %951 = vmatprep.subr.mxu0 0.0
        %952 = vmatpush1.xpose.msra.mxu0 %v919
        %953 = vmatprep.subr.mxu0 0.0
        %954 = vmatpush2.xpose.msra.mxu0 0.0
        %955 = vmatprep.subr.mxu0 0.0
        %956 = vmatpush2.xpose.msra.mxu0 0.0
        %957 = vmatprep.subr.mxu0 0.0
        %958 = vmatpush2.xpose.msra.mxu0 0.0
        %959 = vmatprep.subr.mxu0 0.0
        %960 = vmatpush2.xpose.msra.mxu0 0.0
        %961 = vmatprep.subr.mxu0 0.0
        %962 = vmatpush2.xpose.msra.mxu0 0.0
        %963 = vmatprep.subr.mxu0 0.0
        %964 = vmatpush2.xpose.msra.mxu0 0.0
        %965 = vmatprep.subr.mxu0 0.0
        %966 = vmatpush2.xpose.msra.mxu0 0.0
        %967 = vmatprep.subr.mxu0 0.0
        %968 = vmatpush2.xpose.msra.mxu0 0.0
        %969 = vmatprep.subr.mxu0 0.0
        %970 = vmatpush2.xpose.msra.mxu0 0.0
        %971 = vmatprep.subr.mxu0 0.0
        %972 = vmatpush2.xpose.msra.mxu0 0.0
        %973 = vmatprep.subr.mxu0 0.0
        %974 = vmatpush2.xpose.msra.mxu0 0.0
        %975 = vmatprep.subr.mxu0 0.0
        %976 = vmatpush2.xpose.msra.mxu0 0.0
        %977 = vmatprep.subr.mxu0 0.0
        %978 = vmatpush2.xpose.msra.mxu0 0.0
        %979 = vmatprep.subr.mxu0 0.0
        %980 = vmatpush2.xpose.msra.mxu0 0.0
        %981 = vmatprep.subr.mxu0 0.0
        %982 = vmatpush2.xpose.msra.mxu0 0.0
        %983 = vmatprep.subr.mxu0 0.0
        %984 = vmatpush2.xpose.msra.mxu0 0.0
        %985 = vmatprep.mubr.f32.mxu0 0.0
        %986 = vmatmul.mubr.f32.gmra.mxu0 %v917
        %v987 = vpop.f32.mrf.mxu0
        %v988 = vadd.f32 0.0, %v987
        %v989 = vpop.f32.mrf.mxu0
        %990 = vdwg.mxu0
        %v991 = vmul.f32 %v988, 0.25
        %v992 = vadd.f32 %v991, %v822
        %v993 = vsel %vm825, %v992, -inf
        %994 = vmax.xlane.f32.xlu0 %v993
        %v995 = vpop.xlane.xlu0 %994
        %v996 = vsub.f32 %v992, %v995
        %v997 = vmul.f32 %v996, 1.442695
        %v998 = vpow.pop %v997
        %v999 = vsel %vm825, %v998, 0.0
        %1000 = vadd.xlane.f32.xlu0 %v999
        %v1001 = vpop.xlane.xlu0 %1000
        %v1002 = vrcp.pop %v1001
        %v1003 = vmul.f32 %v998, %v1002
        %1004 = vrot.lane.b32.xlu0 %v734, 48
        %v1005 = vpop.permute.xlu0 %1004
        %v1008 = vsel %vm825, %v1003, 0
        %1010 = vmatprep.subr.mxu0 0.0
        %1011 = vmatpush1.msra.mxu0 0.0
        %1012 = vmatprep.subr.mxu0 0.0
        %1013 = vmatpush1.msra.mxu0 0.0
        %1014 = vmatprep.subr.mxu0 0.0
        %1015 = vmatpush1.msra.mxu0 0.0
        %1016 = vmatprep.subr.mxu0 0.0
        %1017 = vmatpush1.msra.mxu0 0.0
        %1018 = vmatprep.subr.mxu0 0.0
        %1019 = vmatpush1.msra.mxu0 0.0
        %1020 = vmatprep.subr.mxu0 0.0
        %1021 = vmatpush1.msra.mxu0 0.0
        %1022 = vmatprep.subr.mxu0 0.0
        %1023 = vmatpush1.msra.mxu0 0.0
        %1024 = vmatprep.subr.mxu0 0.0
        %1025 = vmatpush1.msra.mxu0 0.0
        %1026 = vmatprep.subr.mxu0 0.0
        %1027 = vmatpush1.msra.mxu0 0.0
        %1028 = vmatprep.subr.mxu0 0.0
        %1029 = vmatpush1.msra.mxu0 0.0
        %1030 = vmatprep.subr.mxu0 0.0
        %1031 = vmatpush1.msra.mxu0 0.0
        %1032 = vmatprep.subr.mxu0 0.0
        %1033 = vmatpush1.msra.mxu0 0.0
        %1034 = vmatprep.subr.mxu0 0.0
        %1035 = vmatpush1.msra.mxu0 0.0
        %1036 = vmatprep.subr.mxu0 0.0
        %1037 = vmatpush1.msra.mxu0 0.0
        %1038 = vmatprep.subr.mxu0 0.0
        %1039 = vmatpush1.msra.mxu0 0.0
        %1040 = vmatprep.subr.mxu0 0.0
        %1041 = vmatpush1.msra.mxu0 %v1005
        %1042 = vmatprep.subr.mxu0 0.0
        %1043 = vmatpush2.msra.mxu0 0.0
        %1044 = vmatprep.subr.mxu0 0.0
        %1045 = vmatpush2.msra.mxu0 0.0
        %1046 = vmatprep.subr.mxu0 0.0
        %1047 = vmatpush2.msra.mxu0 0.0
        %1048 = vmatprep.subr.mxu0 0.0
        %1049 = vmatpush2.msra.mxu0 0.0
        %1050 = vmatprep.subr.mxu0 0.0
        %1051 = vmatpush2.msra.mxu0 0.0
        %1052 = vmatprep.subr.mxu0 0.0
        %1053 = vmatpush2.msra.mxu0 0.0
        %1054 = vmatprep.subr.mxu0 0.0
        %1055 = vmatpush2.msra.mxu0 0.0
        %1056 = vmatprep.subr.mxu0 0.0
        %1057 = vmatpush2.msra.mxu0 0.0
        %1058 = vmatprep.subr.mxu0 0.0
        %1059 = vmatpush2.msra.mxu0 0.0
        %1060 = vmatprep.subr.mxu0 0.0
        %1061 = vmatpush2.msra.mxu0 0.0
        %1062 = vmatprep.subr.mxu0 0.0
        %1063 = vmatpush2.msra.mxu0 0.0
        %1064 = vmatprep.subr.mxu0 0.0
        %1065 = vmatpush2.msra.mxu0 0.0
        %1066 = vmatprep.subr.mxu0 0.0
        %1067 = vmatpush2.msra.mxu0 0.0
        %1068 = vmatprep.subr.mxu0 0.0
        %1069 = vmatpush2.msra.mxu0 0.0
        %1070 = vmatprep.subr.mxu0 0.0
        %1071 = vmatpush2.msra.mxu0 0.0
        %1072 = vmatprep.subr.mxu0 0.0
        %1073 = vmatpush2.msra.mxu0 0.0
        %1074 = vmatprep.mubr.f32.mxu0 0.0
        %1075 = vmatmul.mubr.f32.gmra.mxu0 %v1008
        %v1076 = vpop.f32.mrf.mxu0
        %v1077 = vadd.f32 0.0, %v1076
        %v1078 = vpop.f32.mrf.mxu0
        %1079 = vdwg.mxu0
        %1081 = vrot.lane.b32.xlu0 %v1077, 16
        %v1082 = vpop.permute.xlu0 %1081
        %v1084 = vsel %vm742, %v910, %v1082
        %v1085 = vpack.c.bf16 %v1084, %v1084
        %v1086 = vld [vmem:[%s6] sm:$0xf]
        %v1087 = vld [vmem:[%s6 + $0x4] sm:$0xf]
        %v1088 = vld [vmem:[%s6 + $0x8] sm:$0xf]
        %v1089 = vld [vmem:[%s6 + $0xc] sm:$0xf]
        %v1090 = vld [vmem:[%s7] sm:$0x1]
        %v1092 = vlaneseq
        %v1093 = vshrl.u32 %v1092, 7
        %v1094 = vsub.s32 0, %v1093
        %v1095 = vrot.slane %v1090, %v1094
        %v1101 = vunpack.c.l.b16 %v1086
        %v1102 = vunpack.c.l.b16 %v1087
        %v1103 = vunpack.c.l.b16 %v1088
        %v1104 = vunpack.c.l.b16 %v1089
        %v1105 = vpack.c.b16 %v1102, %v1101
        %v1106 = vpack.c.b16 %v1104, %v1103
        %v1110 = vsel %vm642, %v1085, 0
        %1112 = vmatprep.subr.bf16.mxu0 0
        %1113 = vmatpush1.bf16.msra.mxu0 0
        %1114 = vmatprep.subr.bf16.mxu0 0
        %1115 = vmatpush1.bf16.msra.mxu0 0
        %1116 = vmatprep.subr.bf16.mxu0 0
        %1117 = vmatpush1.bf16.msra.mxu0 0
        %1118 = vmatprep.subr.bf16.mxu0 0
        %1119 = vmatpush1.bf16.msra.mxu0 0
        %1120 = vmatprep.subr.bf16.mxu0 0
        %1121 = vmatpush1.bf16.msra.mxu0 0
        %1122 = vmatprep.subr.bf16.mxu0 0
        %1123 = vmatpush1.bf16.msra.mxu0 0
        %1124 = vmatprep.subr.bf16.mxu0 0
        %1125 = vmatpush1.bf16.msra.mxu0 %v1106
        %1126 = vmatprep.subr.bf16.mxu0 0
        %1127 = vmatpush1.bf16.msra.mxu0 %v1105
        %1128 = vmatprep.subr.bf16.mxu0 0
        %1129 = vmatpush2.bf16.msra.mxu0 0
        %1130 = vmatprep.subr.bf16.mxu0 0
        %1131 = vmatpush2.bf16.msra.mxu0 0
        %1132 = vmatprep.subr.bf16.mxu0 0
        %1133 = vmatpush2.bf16.msra.mxu0 0
        %1134 = vmatprep.subr.bf16.mxu0 0
        %1135 = vmatpush2.bf16.msra.mxu0 0
        %1136 = vmatprep.subr.bf16.mxu0 0
        %1137 = vmatpush2.bf16.msra.mxu0 0
        %1138 = vmatprep.subr.bf16.mxu0 0
        %1139 = vmatpush2.bf16.msra.mxu0 0
        %1140 = vmatprep.subr.bf16.mxu0 0
        %1141 = vmatpush2.bf16.msra.mxu0 0
        %1142 = vmatprep.subr.bf16.mxu0 0
        %1143 = vmatpush2.bf16.msra.mxu0 0
        %1144 = vmatprep.mubr.bf16.mxu0 0
        %1145 = vmatmul.mubr.bf16.gmra.mxu0 %v1110
        %v1146 = vpop.f32.mrf.mxu0
        %v1147 = vadd.f32 %v1095, %v1146
        %v1148 = vpop.f32.mrf.mxu0
        %v1149 = vpop.f32.mrf.mxu0
        %v1150 = vpop.f32.mrf.mxu0
        %1151 = vdwg.mxu0
        %v1152 = vadd.f32 %v1147, %v670
        %v1153 = vld [vmem:[%s8] sm:$0x1]
        %v1154 = vld [vmem:[%s9] sm:$0x1]
        %v1155 = vsel %vm642, %v1152, 0.0
        %1156 = vadd.xlane.f32.xlu0 %v1155
        %v1157 = vpop.xlane.xlu0 %1156
        %v1158 = vmul.f32 %v1157, %v646
        %v1159 = vsub.f32 %v1152, %v1158
        %v1160 = vmul.f32 %v1159, %v1159
        %v1161 = vsel %vm642, %v1160, 0.0
        %1162 = vadd.xlane.f32.xlu0 %v1161
        %v1163 = vpop.xlane.xlu0 %1162
        %v1164 = vmul.f32 %v1163, %v646
        %v1165 = vadd.f32 %v1164, 1e-12
        %v1166 = vrsqrt.pop %v1165
        %v1167 = vmul.f32 %v1159, %v1166
        %v1169 = vlaneseq
        %v1170 = vshrl.u32 %v1169, 7
        %v1171 = vsub.s32 0, %v1170
        %v1172 = vrot.slane %v1153, %v1171
        %v1174 = vmul.f32 %v1167, %v1172
        %v1176 = vlaneseq
        %v1177 = vshrl.u32 %v1176, 7
        %v1178 = vsub.s32 0, %v1177
        %v1179 = vrot.slane %v1154, %v1178
        %v1181 = vadd.f32 %v1174, %v1179
        %v1182 = vpack.c.bf16 %v1181, %v1181
        %v1183 = vld [vmem:[%s10] sm:$0xf]
        %v1184 = vld [vmem:[%s10 + $0x4] sm:$0xf]
        %v1185 = vld [vmem:[%s10 + $0x8] sm:$0xf]
        %v1186 = vld [vmem:[%s10 + $0xc] sm:$0xf]
        %v1187 = vld [vmem:[%s11] sm:$0x1]
        %v1189 = vlaneseq
        %v1190 = vshrl.u32 %v1189, 7
        %v1191 = vsub.s32 0, %v1190
        %v1192 = vrot.slane %v1187, %v1191
        %v1198 = vunpack.c.l.b16 %v1183
        %v1199 = vunpack.c.l.b16 %v1184
        %v1200 = vunpack.c.l.b16 %v1185
        %v1201 = vunpack.c.l.b16 %v1186
        %v1202 = vpack.c.b16 %v1199, %v1198
        %v1203 = vpack.c.b16 %v1201, %v1200
        %v1207 = vsel %vm642, %v1182, 0
        %1209 = vmatprep.subr.bf16.mxu0 0
        %1210 = vmatpush1.bf16.msra.mxu0 0
        %1211 = vmatprep.subr.bf16.mxu0 0
        %1212 = vmatpush1.bf16.msra.mxu0 0
        %1213 = vmatprep.subr.bf16.mxu0 0
        %1214 = vmatpush1.bf16.msra.mxu0 0
        %1215 = vmatprep.subr.bf16.mxu0 0
        %1216 = vmatpush1.bf16.msra.mxu0 0
        %1217 = vmatprep.subr.bf16.mxu0 0
        %1218 = vmatpush1.bf16.msra.mxu0 0
        %1219 = vmatprep.subr.bf16.mxu0 0
        %1220 = vmatpush1.bf16.msra.mxu0 0
        %1221 = vmatprep.subr.bf16.mxu0 0
        %1222 = vmatpush1.bf16.msra.mxu0 %v1203
        %1223 = vmatprep.subr.bf16.mxu0 0
        %1224 = vmatpush1.bf16.msra.mxu0 %v1202
        %1225 = vmatprep.subr.bf16.mxu0 0
        %1226 = vmatpush2.bf16.msra.mxu0 0
        %1227 = vmatprep.subr.bf16.mxu0 0
        %1228 = vmatpush2.bf16.msra.mxu0 0
        %1229 = vmatprep.subr.bf16.mxu0 0
        %1230 = vmatpush2.bf16.msra.mxu0 0
        %1231 = vmatprep.subr.bf16.mxu0 0
        %1232 = vmatpush2.bf16.msra.mxu0 0
        %1233 = vmatprep.subr.bf16.mxu0 0
        %1234 = vmatpush2.bf16.msra.mxu0 0
        %1235 = vmatprep.subr.bf16.mxu0 0
        %1236 = vmatpush2.bf16.msra.mxu0 0
        %1237 = vmatprep.subr.bf16.mxu0 0
        %1238 = vmatpush2.bf16.msra.mxu0 0
        %1239 = vmatprep.subr.bf16.mxu0 0
        %1240 = vmatpush2.bf16.msra.mxu0 0
        %1241 = vmatprep.mubr.bf16.mxu0 0
        %1242 = vmatmul.mubr.bf16.gmra.mxu0 %v1207
        %v1243 = vpop.f32.mrf.mxu0
        %v1244 = vadd.f32 %v1192, %v1243
        %v1245 = vpop.f32.mrf.mxu0
        %v1246 = vpop.f32.mrf.mxu0
        %v1247 = vpop.f32.mrf.mxu0
        %1248 = vdwg.mxu0
        %v1249 = vmul.f32 %v1244, 0.5
        %v1250 = vmul.f32 %v1244, 0.044715
        %v1251 = vmul.f32 %v1250, %v1244
        %v1252 = vmul.f32 %v1251, %v1244
        %v1253 = vadd.f32 %v1244, %v1252
        %v1254 = vmul.f32 %v1253, 0.7978846
        %v1255 = vtanh.pop %v1254
        %v1256 = vadd.f32 %v1255, 1.0
        %v1257 = vmul.f32 %v1249, %v1256
        %v1258 = vpack.c.bf16 %v1257, %v1257
        %v1259 = vld [vmem:[%s12] sm:$0xf]
        %v1260 = vld [vmem:[%s12 + $0x4] sm:$0xf]
        %v1261 = vld [vmem:[%s12 + $0x8] sm:$0xf]
        %v1262 = vld [vmem:[%s12 + $0xc] sm:$0xf]
        %v1263 = vld [vmem:[%s12 + $0x10] sm:$0xf]
        %v1264 = vld [vmem:[%s12 + $0x14] sm:$0xf]
        %v1265 = vld [vmem:[%s12 + $0x18] sm:$0xf]
        %v1266 = vld [vmem:[%s12 + $0x1c] sm:$0xf]
        %v1267 = vld [vmem:[%s13] sm:$0x1]
        %v1269 = vlaneseq
        %v1270 = vshrl.u32 %v1269, 7
        %v1271 = vsub.s32 0, %v1270
        %v1272 = vrot.slane %v1267, %v1271
        %v1282 = vunpack.c.l.b16 %v1259
        %v1283 = vunpack.c.l.b16 %v1260
        %v1284 = vunpack.c.l.b16 %v1261
        %v1285 = vunpack.c.l.b16 %v1262
        %v1286 = vunpack.c.l.b16 %v1263
        %v1287 = vunpack.c.l.b16 %v1264
        %v1288 = vunpack.c.l.b16 %v1265
        %v1289 = vunpack.c.l.b16 %v1266
        %v1290 = vpack.c.b16 %v1283, %v1282
        %v1291 = vpack.c.b16 %v1285, %v1284
        %v1292 = vpack.c.b16 %v1287, %v1286
        %v1293 = vpack.c.b16 %v1289, %v1288
        %vm1298 = vcmask 523264
        %v1300 = vsel %vm1298, %v1258, 0
        %1302 = vmatprep.subr.bf16.mxu0 0
        %1303 = vmatpush1.bf16.msra.mxu0 0
        %1304 = vmatprep.subr.bf16.mxu0 0
        %1305 = vmatpush1.bf16.msra.mxu0 0
        %1306 = vmatprep.subr.bf16.mxu0 0
        %1307 = vmatpush1.bf16.msra.mxu0 0
        %1308 = vmatprep.subr.bf16.mxu0 0
        %1309 = vmatpush1.bf16.msra.mxu0 0
        %1310 = vmatprep.subr.bf16.mxu0 0
        %1311 = vmatpush1.bf16.msra.mxu0 %v1293
        %1312 = vmatprep.subr.bf16.mxu0 0
        %1313 = vmatpush1.bf16.msra.mxu0 %v1292
        %1314 = vmatprep.subr.bf16.mxu0 0
        %1315 = vmatpush1.bf16.msra.mxu0 %v1291
        %1316 = vmatprep.subr.bf16.mxu0 0
        %1317 = vmatpush1.bf16.msra.mxu0 %v1290
        %1318 = vmatprep.subr.bf16.mxu0 0
        %1319 = vmatpush2.bf16.msra.mxu0 0
        %1320 = vmatprep.subr.bf16.mxu0 0
        %1321 = vmatpush2.bf16.msra.mxu0 0
        %1322 = vmatprep.subr.bf16.mxu0 0
        %1323 = vmatpush2.bf16.msra.mxu0 0
        %1324 = vmatprep.subr.bf16.mxu0 0
        %1325 = vmatpush2.bf16.msra.mxu0 0
        %1326 = vmatprep.subr.bf16.mxu0 0
        %1327 = vmatpush2.bf16.msra.mxu0 0
        %1328 = vmatprep.subr.bf16.mxu0 0
        %1329 = vmatpush2.bf16.msra.mxu0 0
        %1330 = vmatprep.subr.bf16.mxu0 0
        %1331 = vmatpush2.bf16.msra.mxu0 0
        %1332 = vmatprep.subr.bf16.mxu0 0
        %1333 = vmatpush2.bf16.msra.mxu0 0
        %1334 = vmatprep.mubr.bf16.mxu0 0
        %1335 = vmatmul.mubr.bf16.gmra.mxu0 %v1300
        %v1336 = vpop.f32.mrf.mxu0
        %v1337 = vadd.f32 %v1272, %v1336
        %v1338 = vpop.f32.mrf.mxu0
        %v1339 = vpop.f32.mrf.mxu0
        %v1340 = vpop.f32.mrf.mxu0
        %1341 = vdwg.mxu0
        %v1342 = vadd.f32 %v1337, %v1181
        %v1343 = vld [vmem:[%s14] sm:$0x1]
        %v1344 = vld [vmem:[%s15] sm:$0x1]
        %v1345 = vsel %vm642, %v1342, 0.0
        %1346 = vadd.xlane.f32.xlu0 %v1345
        %v1347 = vpop.xlane.xlu0 %1346
        %v1348 = vmul.f32 %v1347, %v646
        %v1349 = vsub.f32 %v1342, %v1348
        %v1350 = vmul.f32 %v1349, %v1349
        %v1351 = vsel %vm642, %v1350, 0.0
        %1352 = vadd.xlane.f32.xlu0 %v1351
        %v1353 = vpop.xlane.xlu0 %1352
        %v1354 = vmul.f32 %v1353, %v646
        %v1355 = vadd.f32 %v1354, 1e-12
        %v1356 = vrsqrt.pop %v1355
        %v1357 = vmul.f32 %v1349, %v1356
        %v1359 = vlaneseq
        %v1360 = vshrl.u32 %v1359, 7
        %v1361 = vsub.s32 0, %v1360
        %v1362 = vrot.slane %v1343, %v1361
        %v1364 = vmul.f32 %v1357, %v1362
        %v1366 = vlaneseq
        %v1367 = vshrl.u32 %v1366, 7
        %v1368 = vsub.s32 0, %v1367
        %v1369 = vrot.slane %v1344, %v1368
        %v1371 = vadd.f32 %v1364, %v1369
        %v1372 = vpack.c.bf16 %v1371, %v1371
        %s1373 = scalar_lea.vmem %s4, 16
        %v1374 = vld [vmem:[%s1373] sm:$0xf]
        %v1375 = vld [vmem:[%s1373 + $0x4] sm:$0xf]
        %v1376 = vld [vmem:[%s1373 + $0x8] sm:$0xf]
        %v1377 = vld [vmem:[%s1373 + $0xc] sm:$0xf]
        %s1378 = scalar_lea.vmem %s5, 1
        %v1379 = vld [vmem:[%s1378] sm:$0x1]
        %v1381 = vlaneseq
        %v1382 = vshrl.u32 %v1381, 7
        %v1383 = vsub.s32 0, %v1382
        %v1384 = vrot.slane %v1379, %v1383
        %v1390 = vunpack.c.l.b16 %v1374
        %v1391 = vunpack.c.l.b16 %v1375
        %v1392 = vunpack.c.l.b16 %v1376
        %v1393 = vunpack.c.l.b16 %v1377
        %v1394 = vpack.c.b16 %v1391, %v1390
        %v1395 = vpack.c.b16 %v1393, %v1392
        %v1399 = vsel %vm642, %v1372, 0
        %1401 = vmatprep.subr.bf16.mxu0 0
        %1402 = vmatpush1.bf16.msra.mxu0 0
        %1403 = vmatprep.subr.bf16.mxu0 0
        %1404 = vmatpush1.bf16.msra.mxu0 0
        %1405 = vmatprep.subr.bf16.mxu0 0
        %1406 = vmatpush1.bf16.msra.mxu0 0
        %1407 = vmatprep.subr.bf16.mxu0 0
        %1408 = vmatpush1.bf16.msra.mxu0 0
        %1409 = vmatprep.subr.bf16.mxu0 0
        %1410 = vmatpush1.bf16.msra.mxu0 0
        %1411 = vmatprep.subr.bf16.mxu0 0
        %1412 = vmatpush1.bf16.msra.mxu0 0
        %1413 = vmatprep.subr.bf16.mxu0 0
        %1414 = vmatpush1.bf16.msra.mxu0 %v1395
        %1415 = vmatprep.subr.bf16.mxu0 0
        %1416 = vmatpush1.bf16.msra.mxu0 %v1394
        %1417 = vmatprep.subr.bf16.mxu0 0
        %1418 = vmatpush2.bf16.msra.mxu0 0
        %1419 = vmatprep.subr.bf16.mxu0 0
        %1420 = vmatpush2.bf16.msra.mxu0 0
        %1421 = vmatprep.subr.bf16.mxu0 0
        %1422 = vmatpush2.bf16.msra.mxu0 0
        %1423 = vmatprep.subr.bf16.mxu0 0
        %1424 = vmatpush2.bf16.msra.mxu0 0
        %1425 = vmatprep.subr.bf16.mxu0 0
        %1426 = vmatpush2.bf16.msra.mxu0 0
        %1427 = vmatprep.subr.bf16.mxu0 0
        %1428 = vmatpush2.bf16.msra.mxu0 0
        %1429 = vmatprep.subr.bf16.mxu0 0
        %1430 = vmatpush2.bf16.msra.mxu0 0
        %1431 = vmatprep.subr.bf16.mxu0 0
        %1432 = vmatpush2.bf16.msra.mxu0 0
        %1433 = vmatprep.mubr.bf16.mxu0 0
        %1434 = vmatmul.mubr.bf16.gmra.mxu0 %v1399
        %v1435 = vpop.f32.mrf.mxu0
        %v1436 = vadd.f32 %v1384, %v1435
        %v1437 = vpop.f32.mrf.mxu0
        %v1438 = vpop.f32.mrf.mxu0
        %v1439 = vpop.f32.mrf.mxu0
        %1440 = vdwg.mxu0
        %1442 = vrot.lane.b32.xlu0 %v1436, 96
        %v1443 = vpop.permute.xlu0 %1442
        %v1444 = vsel %vm742, %v1436, 0
        %v1446 = vsel %vm742, %v1443, 0
        %1448 = vmatprep.subr.mxu0 0.0
        %1449 = vmatpush1.xpose.msra.mxu0 0.0
        %1450 = vmatprep.subr.mxu0 0.0
        %1451 = vmatpush1.xpose.msra.mxu0 0.0
        %1452 = vmatprep.subr.mxu0 0.0
        %1453 = vmatpush1.xpose.msra.mxu0 0.0
        %1454 = vmatprep.subr.mxu0 0.0
        %1455 = vmatpush1.xpose.msra.mxu0 0.0
        %1456 = vmatprep.subr.mxu0 0.0
        %1457 = vmatpush1.xpose.msra.mxu0 0.0
        %1458 = vmatprep.subr.mxu0 0.0
        %1459 = vmatpush1.xpose.msra.mxu0 0.0
        %1460 = vmatprep.subr.mxu0 0.0
        %1461 = vmatpush1.xpose.msra.mxu0 0.0
        %1462 = vmatprep.subr.mxu0 0.0
        %1463 = vmatpush1.xpose.msra.mxu0 0.0
        %1464 = vmatprep.subr.mxu0 0.0
        %1465 = vmatpush1.xpose.msra.mxu0 0.0
        %1466 = vmatprep.subr.mxu0 0.0
        %1467 = vmatpush1.xpose.msra.mxu0 0.0
        %1468 = vmatprep.subr.mxu0 0.0
        %1469 = vmatpush1.xpose.msra.mxu0 0.0
        %1470 = vmatprep.subr.mxu0 0.0
        %1471 = vmatpush1.xpose.msra.mxu0 0.0
        %1472 = vmatprep.subr.mxu0 0.0
        %1473 = vmatpush1.xpose.msra.mxu0 0.0
        %1474 = vmatprep.subr.mxu0 0.0
        %1475 = vmatpush1.xpose.msra.mxu0 0.0
        %1476 = vmatprep.subr.mxu0 0.0
        %1477 = vmatpush1.xpose.msra.mxu0 0.0
        %1478 = vmatprep.subr.mxu0 0.0
        %1479 = vmatpush1.xpose.msra.mxu0 %v1446
        %1480 = vmatprep.subr.mxu0 0.0
        %1481 = vmatpush2.xpose.msra.mxu0 0.0
        %1482 = vmatprep.subr.mxu0 0.0
        %1483 = vmatpush2.xpose.msra.mxu0 0.0
        %1484 = vmatprep.subr.mxu0 0.0
        %1485 = vmatpush2.xpose.msra.mxu0 0.0
        %1486 = vmatprep.subr.mxu0 0.0
        %1487 = vmatpush2.xpose.msra.mxu0 0.0
        %1488 = vmatprep.subr.mxu0 0.0
        %1489 = vmatpush2.xpose.msra.mxu0 0.0
        %1490 = vmatprep.subr.mxu0 0.0
        %1491 = vmatpush2.xpose.msra.mxu0 0.0
        %1492 = vmatprep.subr.mxu0 0.0
        %1493 = vmatpush2.xpose.msra.mxu0 0.0
        %1494 = vmatprep.subr.mxu0 0.0
        %1495 = vmatpush2.xpose.msra.mxu0 0.0
        %1496 = vmatprep.subr.mxu0 0.0
        %1497 = vmatpush2.xpose.msra.mxu0 0.0
        %1498 = vmatprep.subr.mxu0 0.0
        %1499 = vmatpush2.xpose.msra.mxu0 0.0
        %1500 = vmatprep.subr.mxu0 0.0
        %1501 = vmatpush2.xpose.msra.mxu0 0.0
        %1502 = vmatprep.subr.mxu0 0.0
        %1503 = vmatpush2.xpose.msra.mxu0 0.0
        %1504 = vmatprep.subr.mxu0 0.0
        %1505 = vmatpush2.xpose.msra.mxu0 0.0
        %1506 = vmatprep.subr.mxu0 0.0
        %1507 = vmatpush2.xpose.msra.mxu0 0.0
        %1508 = vmatprep.subr.mxu0 0.0
        %1509 = vmatpush2.xpose.msra.mxu0 0.0
        %1510 = vmatprep.subr.mxu0 0.0
        %1511 = vmatpush2.xpose.msra.mxu0 0.0
        %1512 = vmatprep.mubr.f32.mxu0 0.0
        %1513 = vmatmul.mubr.f32.gmra.mxu0 %v1444
        %v1514 = vpop.f32.mrf.mxu0
        %v1515 = vadd.f32 0.0, %v1514
        %v1516 = vpop.f32.mrf.mxu0
        %1517 = vdwg.mxu0
        %v1518 = vmul.f32 %v1515, 0.25
        %v1519 = vadd.f32 %v1518, %v822
        %v1520 = vsel %vm825, %v1519, -inf
        %1521 = vmax.xlane.f32.xlu0 %v1520
        %v1522 = vpop.xlane.xlu0 %1521
        %v1523 = vsub.f32 %v1519, %v1522
        %v1524 = vmul.f32 %v1523, 1.442695
        %v1525 = vpow.pop %v1524
        %v1526 = vsel %vm825, %v1525, 0.0
        %1527 = vadd.xlane.f32.xlu0 %v1526
        %v1528 = vpop.xlane.xlu0 %1527
        %v1529 = vrcp.pop %v1528
        %v1530 = vmul.f32 %v1525, %v1529
        %1531 = vrot.lane.b32.xlu0 %v1436, 64
        %v1532 = vpop.permute.xlu0 %1531
        %v1535 = vsel %vm825, %v1530, 0
        %1537 = vmatprep.subr.mxu0 0.0
        %1538 = vmatpush1.msra.mxu0 0.0
        %1539 = vmatprep.subr.mxu0 0.0
        %1540 = vmatpush1.msra.mxu0 0.0
        %1541 = vmatprep.subr.mxu0 0.0
        %1542 = vmatpush1.msra.mxu0 0.0
        %1543 = vmatprep.subr.mxu0 0.0
        %1544 = vmatpush1.msra.mxu0 0.0
        %1545 = vmatprep.subr.mxu0 0.0
        %1546 = vmatpush1.msra.mxu0 0.0
        %1547 = vmatprep.subr.mxu0 0.0
        %1548 = vmatpush1.msra.mxu0 0.0
        %1549 = vmatprep.subr.mxu0 0.0
        %1550 = vmatpush1.msra.mxu0 0.0
        %1551 = vmatprep.subr.mxu0 0.0
        %1552 = vmatpush1.msra.mxu0 0.0
        %1553 = vmatprep.subr.mxu0 0.0
        %1554 = vmatpush1.msra.mxu0 0.0
        %1555 = vmatprep.subr.mxu0 0.0
        %1556 = vmatpush1.msra.mxu0 0.0
        %1557 = vmatprep.subr.mxu0 0.0
        %1558 = vmatpush1.msra.mxu0 0.0
        %1559 = vmatprep.subr.mxu0 0.0
        %1560 = vmatpush1.msra.mxu0 0.0
        %1561 = vmatprep.subr.mxu0 0.0
        %1562 = vmatpush1.msra.mxu0 0.0
        %1563 = vmatprep.subr.mxu0 0.0
        %1564 = vmatpush1.msra.mxu0 0.0
        %1565 = vmatprep.subr.mxu0 0.0
        %1566 = vmatpush1.msra.mxu0 0.0
        %1567 = vmatprep.subr.mxu0 0.0
        %1568 = vmatpush1.msra.mxu0 %v1532
        %1569 = vmatprep.subr.mxu0 0.0
        %1570 = vmatpush2.msra.mxu0 0.0
        %1571 = vmatprep.subr.mxu0 0.0
        %1572 = vmatpush2.msra.mxu0 0.0
        %1573 = vmatprep.subr.mxu0 0.0
        %1574 = vmatpush2.msra.mxu0 0.0
        %1575 = vmatprep.subr.mxu0 0.0
        %1576 = vmatpush2.msra.mxu0 0.0
        %1577 = vmatprep.subr.mxu0 0.0
        %1578 = vmatpush2.msra.mxu0 0.0
        %1579 = vmatprep.subr.mxu0 0.0
        %1580 = vmatpush2.msra.mxu0 0.0
        %1581 = vmatprep.subr.mxu0 0.0
        %1582 = vmatpush2.msra.mxu0 0.0
        %1583 = vmatprep.subr.mxu0 0.0
        %1584 = vmatpush2.msra.mxu0 0.0
        %1585 = vmatprep.subr.mxu0 0.0
        %1586 = vmatpush2.msra.mxu0 0.0
        %1587 = vmatprep.subr.mxu0 0.0
        %1588 = vmatpush2.msra.mxu0 0.0
        %1589 = vmatprep.subr.mxu0 0.0
        %1590 = vmatpush2.msra.mxu0 0.0
        %1591 = vmatprep.subr.mxu0 0.0
        %1592 = vmatpush2.msra.mxu0 0.0
        %1593 = vmatprep.subr.mxu0 0.0
        %1594 = vmatpush2.msra.mxu0 0.0
        %1595 = vmatprep.subr.mxu0 0.0
        %1596 = vmatpush2.msra.mxu0 0.0
        %1597 = vmatprep.subr.mxu0 0.0
        %1598 = vmatpush2.msra.mxu0 0.0
        %1599 = vmatprep.subr.mxu0 0.0
        %1600 = vmatpush2.msra.mxu0 0.0
        %1601 = vmatprep.mubr.f32.mxu0 0.0
        %1602 = vmatmul.mubr.f32.gmra.mxu0 %v1535
        %v1603 = vpop.f32.mrf.mxu0
        %v1604 = vadd.f32 0.0, %v1603
        %v1605 = vpop.f32.mrf.mxu0
        %1606 = vdwg.mxu0
        %1607 = vrot.lane.b32.xlu0 %v1436, 112
        %v1608 = vpop.permute.xlu0 %1607
        %1609 = vrot.lane.b32.xlu0 %v1436, 80
        %v1610 = vpop.permute.xlu0 %1609
        %v1611 = vsel %vm742, %v1608, 0
        %v1613 = vsel %vm742, %v1610, 0
        %1615 = vmatprep.subr.mxu0 0.0
        %1616 = vmatpush1.xpose.msra.mxu0 0.0
        %1617 = vmatprep.subr.mxu0 0.0
        %1618 = vmatpush1.xpose.msra.mxu0 0.0
        %1619 = vmatprep.subr.mxu0 0.0
        %1620 = vmatpush1.xpose.msra.mxu0 0.0
        %1621 = vmatprep.subr.mxu0 0.0
        %1622 = vmatpush1.xpose.msra.mxu0 0.0
        %1623 = vmatprep.subr.mxu0 0.0
        %1624 = vmatpush1.xpose.msra.mxu0 0.0
        %1625 = vmatprep.subr.mxu0 0.0
        %1626 = vmatpush1.xpose.msra.mxu0 0.0
        %1627 = vmatprep.subr.mxu0 0.0
        %1628 = vmatpush1.xpose.msra.mxu0 0.0
        %1629 = vmatprep.subr.mxu0 0.0
        %1630 = vmatpush1.xpose.msra.mxu0 0.0
        %1631 = vmatprep.subr.mxu0 0.0
        %1632 = vmatpush1.xpose.msra.mxu0 0.0
        %1633 = vmatprep.subr.mxu0 0.0
        %1634 = vmatpush1.xpose.msra.mxu0 0.0
        %1635 = vmatprep.subr.mxu0 0.0
        %1636 = vmatpush1.xpose.msra.mxu0 0.0
        %1637 = vmatprep.subr.mxu0 0.0
        %1638 = vmatpush1.xpose.msra.mxu0 0.0
        %1639 = vmatprep.subr.mxu0 0.0
        %1640 = vmatpush1.xpose.msra.mxu0 0.0
        %1641 = vmatprep.subr.mxu0 0.0
        %1642 = vmatpush1.xpose.msra.mxu0 0.0
        %1643 = vmatprep.subr.mxu0 0.0
        %1644 = vmatpush1.xpose.msra.mxu0 0.0
        %1645 = vmatprep.subr.mxu0 0.0
        %1646 = vmatpush1.xpose.msra.mxu0 %v1613
        %1647 = vmatprep.subr.mxu0 0.0
        %1648 = vmatpush2.xpose.msra.mxu0 0.0
        %1649 = vmatprep.subr.mxu0 0.0
        %1650 = vmatpush2.xpose.msra.mxu0 0.0
        %1651 = vmatprep.subr.mxu0 0.0
        %1652 = vmatpush2.xpose.msra.mxu0 0.0
        %1653 = vmatprep.subr.mxu0 0.0
        %1654 = vmatpush2.xpose.msra.mxu0 0.0
        %1655 = vmatprep.subr.mxu0 0.0
        %1656 = vmatpush2.xpose.msra.mxu0 0.0
        %1657 = vmatprep.subr.mxu0 0.0
        %1658 = vmatpush2.xpose.msra.mxu0 0.0
        %1659 = vmatprep.subr.mxu0 0.0
        %1660 = vmatpush2.xpose.msra.mxu0 0.0
        %1661 = vmatprep.subr.mxu0 0.0
        %1662 = vmatpush2.xpose.msra.mxu0 0.0
        %1663 = vmatprep.subr.mxu0 0.0
        %1664 = vmatpush2.xpose.msra.mxu0 0.0
        %1665 = vmatprep.subr.mxu0 0.0
        %1666 = vmatpush2.xpose.msra.mxu0 0.0
        %1667 = vmatprep.subr.mxu0 0.0
        %1668 = vmatpush2.xpose.msra.mxu0 0.0
        %1669 = vmatprep.subr.mxu0 0.0
        %1670 = vmatpush2.xpose.msra.mxu0 0.0
        %1671 = vmatprep.subr.mxu0 0.0
        %1672 = vmatpush2.xpose.msra.mxu0 0.0
        %1673 = vmatprep.subr.mxu0 0.0
        %1674 = vmatpush2.xpose.msra.mxu0 0.0
        %1675 = vmatprep.subr.mxu0 0.0
        %1676 = vmatpush2.xpose.msra.mxu0 0.0
        %1677 = vmatprep.subr.mxu0 0.0
        %1678 = vmatpush2.xpose.msra.mxu0 0.0
        %1679 = vmatprep.mubr.f32.mxu0 0.0
        %1680 = vmatmul.mubr.f32.gmra.mxu0 %v1611
        %v1681 = vpop.f32.mrf.mxu0
        %v1682 = vadd.f32 0.0, %v1681
        %v1683 = vpop.f32.mrf.mxu0
        %1684 = vdwg.mxu0
        %v1685 = vmul.f32 %v1682, 0.25
        %v1686 = vadd.f32 %v1685, %v822
        %v1687 = vsel %vm825, %v1686, -inf
        %1688 = vmax.xlane.f32.xlu0 %v1687
        %v1689 = vpop.xlane.xlu0 %1688
        %v1690 = vsub.f32 %v1686, %v1689
        %v1691 = vmul.f32 %v1690, 1.442695
        %v1692 = vpow.pop %v1691
        %v1693 = vsel %vm825, %v1692, 0.0
        %1694 = vadd.xlane.f32.xlu0 %v1693
        %v1695 = vpop.xlane.xlu0 %1694
        %v1696 = vrcp.pop %v1695
        %v1697 = vmul.f32 %v1692, %v1696
        %1698 = vrot.lane.b32.xlu0 %v1436, 48
        %v1699 = vpop.permute.xlu0 %1698
        %v1702 = vsel %vm825, %v1697, 0
        %1704 = vmatprep.subr.mxu0 0.0
        %1705 = vmatpush1.msra.mxu0 0.0
        %1706 = vmatprep.subr.mxu0 0.0
        %1707 = vmatpush1.msra.mxu0 0.0
        %1708 = vmatprep.subr.mxu0 0.0
        %1709 = vmatpush1.msra.mxu0 0.0
        %1710 = vmatprep.subr.mxu0 0.0
        %1711 = vmatpush1.msra.mxu0 0.0
        %1712 = vmatprep.subr.mxu0 0.0
        %1713 = vmatpush1.msra.mxu0 0.0
        %1714 = vmatprep.subr.mxu0 0.0
        %1715 = vmatpush1.msra.mxu0 0.0
        %1716 = vmatprep.subr.mxu0 0.0
        %1717 = vmatpush1.msra.mxu0 0.0
        %1718 = vmatprep.subr.mxu0 0.0
        %1719 = vmatpush1.msra.mxu0 0.0
        %1720 = vmatprep.subr.mxu0 0.0
        %1721 = vmatpush1.msra.mxu0 0.0
        %1722 = vmatprep.subr.mxu0 0.0
        %1723 = vmatpush1.msra.mxu0 0.0
        %1724 = vmatprep.subr.mxu0 0.0
        %1725 = vmatpush1.msra.mxu0 0.0
        %1726 = vmatprep.subr.mxu0 0.0
        %1727 = vmatpush1.msra.mxu0 0.0
        %1728 = vmatprep.subr.mxu0 0.0
        %1729 = vmatpush1.msra.mxu0 0.0
        %1730 = vmatprep.subr.mxu0 0.0
        %1731 = vmatpush1.msra.mxu0 0.0
        %1732 = vmatprep.subr.mxu0 0.0
        %1733 = vmatpush1.msra.mxu0 0.0
        %1734 = vmatprep.subr.mxu0 0.0
        %1735 = vmatpush1.msra.mxu0 %v1699
        %1736 = vmatprep.subr.mxu0 0.0
        %1737 = vmatpush2.msra.mxu0 0.0
        %1738 = vmatprep.subr.mxu0 0.0
        %1739 = vmatpush2.msra.mxu0 0.0
        %1740 = vmatprep.subr.mxu0 0.0
        %1741 = vmatpush2.msra.mxu0 0.0
        %1742 = vmatprep.subr.mxu0 0.0
        %1743 = vmatpush2.msra.mxu0 0.0
        %1744 = vmatprep.subr.mxu0 0.0
        %1745 = vmatpush2.msra.mxu0 0.0
        %1746 = vmatprep.subr.mxu0 0.0
        %1747 = vmatpush2.msra.mxu0 0.0
        %1748 = vmatprep.subr.mxu0 0.0
        %1749 = vmatpush2.msra.mxu0 0.0
        %1750 = vmatprep.subr.mxu0 0.0
        %1751 = vmatpush2.msra.mxu0 0.0
        %1752 = vmatprep.subr.mxu0 0.0
        %1753 = vmatpush2.msra.mxu0 0.0
        %1754 = vmatprep.subr.mxu0 0.0
        %1755 = vmatpush2.msra.mxu0 0.0
        %1756 = vmatprep.subr.mxu0 0.0
        %1757 = vmatpush2.msra.mxu0 0.0
        %1758 = vmatprep.subr.mxu0 0.0
        %1759 = vmatpush2.msra.mxu0 0.0
        %1760 = vmatprep.subr.mxu0 0.0
        %1761 = vmatpush2.msra.mxu0 0.0
        %1762 = vmatprep.subr.mxu0 0.0
        %1763 = vmatpush2.msra.mxu0 0.0
        %1764 = vmatprep.subr.mxu0 0.0
        %1765 = vmatpush2.msra.mxu0 0.0
        %1766 = vmatprep.subr.mxu0 0.0
        %1767 = vmatpush2.msra.mxu0 0.0
        %1768 = vmatprep.mubr.f32.mxu0 0.0
        %1769 = vmatmul.mubr.f32.gmra.mxu0 %v1702
        %v1770 = vpop.f32.mrf.mxu0
        %v1771 = vadd.f32 0.0, %v1770
        %v1772 = vpop.f32.mrf.mxu0
        %1773 = vdwg.mxu0
        %1775 = vrot.lane.b32.xlu0 %v1771, 16
        %v1776 = vpop.permute.xlu0 %1775
        %v1778 = vsel %vm742, %v1604, %v1776
        %v1779 = vpack.c.bf16 %v1778, %v1778
        %s1780 = scalar_lea.vmem %s6, 16
        %v1781 = vld [vmem:[%s1780] sm:$0xf]
        %v1782 = vld [vmem:[%s1780 + $0x4] sm:$0xf]
        %v1783 = vld [vmem:[%s1780 + $0x8] sm:$0xf]
        %v1784 = vld [vmem:[%s1780 + $0xc] sm:$0xf]
        %s1785 = scalar_lea.vmem %s7, 1
        %v1786 = vld [vmem:[%s1785] sm:$0x1]
        %v1788 = vlaneseq
        %v1789 = vshrl.u32 %v1788, 7
        %v1790 = vsub.s32 0, %v1789
        %v1791 = vrot.slane %v1786, %v1790
        %v1797 = vunpack.c.l.b16 %v1781
        %v1798 = vunpack.c.l.b16 %v1782
        %v1799 = vunpack.c.l.b16 %v1783
        %v1800 = vunpack.c.l.b16 %v1784
        %v1801 = vpack.c.b16 %v1798, %v1797
        %v1802 = vpack.c.b16 %v1800, %v1799
        %v1806 = vsel %vm642, %v1779, 0
        %1808 = vmatprep.subr.bf16.mxu0 0
        %1809 = vmatpush1.bf16.msra.mxu0 0
        %1810 = vmatprep.subr.bf16.mxu0 0
        %1811 = vmatpush1.bf16.msra.mxu0 0
        %1812 = vmatprep.subr.bf16.mxu0 0
        %1813 = vmatpush1.bf16.msra.mxu0 0
        %1814 = vmatprep.subr.bf16.mxu0 0
        %1815 = vmatpush1.bf16.msra.mxu0 0
        %1816 = vmatprep.subr.bf16.mxu0 0
        %1817 = vmatpush1.bf16.msra.mxu0 0
        %1818 = vmatprep.subr.bf16.mxu0 0
        %1819 = vmatpush1.bf16.msra.mxu0 0
        %1820 = vmatprep.subr.bf16.mxu0 0
        %1821 = vmatpush1.bf16.msra.mxu0 %v1802
        %1822 = vmatprep.subr.bf16.mxu0 0
        %1823 = vmatpush1.bf16.msra.mxu0 %v1801
        %1824 = vmatprep.subr.bf16.mxu0 0
        %1825 = vmatpush2.bf16.msra.mxu0 0
        %1826 = vmatprep.subr.bf16.mxu0 0
        %1827 = vmatpush2.bf16.msra.mxu0 0
        %1828 = vmatprep.subr.bf16.mxu0 0
        %1829 = vmatpush2.bf16.msra.mxu0 0
        %1830 = vmatprep.subr.bf16.mxu0 0
        %1831 = vmatpush2.bf16.msra.mxu0 0
        %1832 = vmatprep.subr.bf16.mxu0 0
        %1833 = vmatpush2.bf16.msra.mxu0 0
        %1834 = vmatprep.subr.bf16.mxu0 0
        %1835 = vmatpush2.bf16.msra.mxu0 0
        %1836 = vmatprep.subr.bf16.mxu0 0
        %1837 = vmatpush2.bf16.msra.mxu0 0
        %1838 = vmatprep.subr.bf16.mxu0 0
        %1839 = vmatpush2.bf16.msra.mxu0 0
        %1840 = vmatprep.mubr.bf16.mxu0 0
        %1841 = vmatmul.mubr.bf16.gmra.mxu0 %v1806
        %v1842 = vpop.f32.mrf.mxu0
        %v1843 = vadd.f32 %v1791, %v1842
        %v1844 = vpop.f32.mrf.mxu0
        %v1845 = vpop.f32.mrf.mxu0
        %v1846 = vpop.f32.mrf.mxu0
        %1847 = vdwg.mxu0
        %v1848 = vadd.f32 %v1843, %v1371
        %s1849 = scalar_lea.vmem %s8, 1
        %v1850 = vld [vmem:[%s1849] sm:$0x1]
        %s1851 = scalar_lea.vmem %s9, 1
        %v1852 = vld [vmem:[%s1851] sm:$0x1]
        %v1853 = vsel %vm642, %v1848, 0.0
        %1854 = vadd.xlane.f32.xlu0 %v1853
        %v1855 = vpop.xlane.xlu0 %1854
        %v1856 = vmul.f32 %v1855, %v646
        %v1857 = vsub.f32 %v1848, %v1856
        %v1858 = vmul.f32 %v1857, %v1857
        %v1859 = vsel %vm642, %v1858, 0.0
        %1860 = vadd.xlane.f32.xlu0 %v1859
        %v1861 = vpop.xlane.xlu0 %1860
        %v1862 = vmul.f32 %v1861, %v646
        %v1863 = vadd.f32 %v1862, 1e-12
        %v1864 = vrsqrt.pop %v1863
        %v1865 = vmul.f32 %v1857, %v1864
        %v1867 = vlaneseq
        %v1868 = vshrl.u32 %v1867, 7
        %v1869 = vsub.s32 0, %v1868
        %v1870 = vrot.slane %v1850, %v1869
        %v1872 = vmul.f32 %v1865, %v1870
        %v1874 = vlaneseq
        %v1875 = vshrl.u32 %v1874, 7
        %v1876 = vsub.s32 0, %v1875
        %v1877 = vrot.slane %v1852, %v1876
        %v1879 = vadd.f32 %v1872, %v1877
        %v1880 = vpack.c.bf16 %v1879, %v1879
        %s1881 = scalar_lea.vmem %s10, 16
        %v1882 = vld [vmem:[%s1881] sm:$0xf]
        %v1883 = vld [vmem:[%s1881 + $0x4] sm:$0xf]
        %v1884 = vld [vmem:[%s1881 + $0x8] sm:$0xf]
        %v1885 = vld [vmem:[%s1881 + $0xc] sm:$0xf]
        %s1886 = scalar_lea.vmem %s11, 1
        %v1887 = vld [vmem:[%s1886] sm:$0x1]
        %v1889 = vlaneseq
        %v1890 = vshrl.u32 %v1889, 7
        %v1891 = vsub.s32 0, %v1890
        %v1892 = vrot.slane %v1887, %v1891
        %v1898 = vunpack.c.l.b16 %v1882
        %v1899 = vunpack.c.l.b16 %v1883
        %v1900 = vunpack.c.l.b16 %v1884
        %v1901 = vunpack.c.l.b16 %v1885
        %v1902 = vpack.c.b16 %v1899, %v1898
        %v1903 = vpack.c.b16 %v1901, %v1900
        %v1907 = vsel %vm642, %v1880, 0
        %1909 = vmatprep.subr.bf16.mxu0 0
        %1910 = vmatpush1.bf16.msra.mxu0 0
        %1911 = vmatprep.subr.bf16.mxu0 0
        %1912 = vmatpush1.bf16.msra.mxu0 0
        %1913 = vmatprep.subr.bf16.mxu0 0
        %1914 = vmatpush1.bf16.msra.mxu0 0
        %1915 = vmatprep.subr.bf16.mxu0 0
        %1916 = vmatpush1.bf16.msra.mxu0 0
        %1917 = vmatprep.subr.bf16.mxu0 0
        %1918 = vmatpush1.bf16.msra.mxu0 0
        %1919 = vmatprep.subr.bf16.mxu0 0
        %1920 = vmatpush1.bf16.msra.mxu0 0
        %1921 = vmatprep.subr.bf16.mxu0 0
        %1922 = vmatpush1.bf16.msra.mxu0 %v1903
        %1923 = vmatprep.subr.bf16.mxu0 0
        %1924 = vmatpush1.bf16.msra.mxu0 %v1902
        %1925 = vmatprep.subr.bf16.mxu0 0
        %1926 = vmatpush2.bf16.msra.mxu0 0
        %1927 = vmatprep.subr.bf16.mxu0 0
        %1928 = vmatpush2.bf16.msra.mxu0 0
        %1929 = vmatprep.subr.bf16.mxu0 0
        %1930 = vmatpush2.bf16.msra.mxu0 0
        %1931 = vmatprep.subr.bf16.mxu0 0
        %1932 = vmatpush2.bf16.msra.mxu0 0
        %1933 = vmatprep.subr.bf16.mxu0 0
        %1934 = vmatpush2.bf16.msra.mxu0 0
        %1935 = vmatprep.subr.bf16.mxu0 0
        %1936 = vmatpush2.bf16.msra.mxu0 0
        %1937 = vmatprep.subr.bf16.mxu0 0
        %1938 = vmatpush2.bf16.msra.mxu0 0
        %1939 = vmatprep.subr.bf16.mxu0 0
        %1940 = vmatpush2.bf16.msra.mxu0 0
        %1941 = vmatprep.mubr.bf16.mxu0 0
        %1942 = vmatmul.mubr.bf16.gmra.mxu0 %v1907
        %v1943 = vpop.f32.mrf.mxu0
        %v1944 = vadd.f32 %v1892, %v1943
        %v1945 = vpop.f32.mrf.mxu0
        %v1946 = vpop.f32.mrf.mxu0
        %v1947 = vpop.f32.mrf.mxu0
        %1948 = vdwg.mxu0
        %v1949 = vmul.f32 %v1944, 0.5
        %v1950 = vmul.f32 %v1944, 0.044715
        %v1951 = vmul.f32 %v1950, %v1944
        %v1952 = vmul.f32 %v1951, %v1944
        %v1953 = vadd.f32 %v1944, %v1952
        %v1954 = vmul.f32 %v1953, 0.7978846
        %v1955 = vtanh.pop %v1954
        %v1956 = vadd.f32 %v1955, 1.0
        %v1957 = vmul.f32 %v1949, %v1956
        %v1958 = vpack.c.bf16 %v1957, %v1957
        %s1959 = scalar_lea.vmem %s12, 32
        %v1960 = vld [vmem:[%s1959] sm:$0xf]
        %v1961 = vld [vmem:[%s1959 + $0x4] sm:$0xf]
        %v1962 = vld [vmem:[%s1959 + $0x8] sm:$0xf]
        %v1963 = vld [vmem:[%s1959 + $0xc] sm:$0xf]
        %v1964 = vld [vmem:[%s1959 + $0x10] sm:$0xf]
        %v1965 = vld [vmem:[%s1959 + $0x14] sm:$0xf]
        %v1966 = vld [vmem:[%s1959 + $0x18] sm:$0xf]
        %v1967 = vld [vmem:[%s1959 + $0x1c] sm:$0xf]
        %s1968 = scalar_lea.vmem %s13, 1
        %v1969 = vld [vmem:[%s1968] sm:$0x1]
        %v1971 = vlaneseq
        %v1972 = vshrl.u32 %v1971, 7
        %v1973 = vsub.s32 0, %v1972
        %v1974 = vrot.slane %v1969, %v1973
        %v1984 = vunpack.c.l.b16 %v1960
        %v1985 = vunpack.c.l.b16 %v1961
        %v1986 = vunpack.c.l.b16 %v1962
        %v1987 = vunpack.c.l.b16 %v1963
        %v1988 = vunpack.c.l.b16 %v1964
        %v1989 = vunpack.c.l.b16 %v1965
        %v1990 = vunpack.c.l.b16 %v1966
        %v1991 = vunpack.c.l.b16 %v1967
        %v1992 = vpack.c.b16 %v1985, %v1984
        %v1993 = vpack.c.b16 %v1987, %v1986
        %v1994 = vpack.c.b16 %v1989, %v1988
        %v1995 = vpack.c.b16 %v1991, %v1990
        %v2001 = vsel %vm1298, %v1958, 0
        %2003 = vmatprep.subr.bf16.mxu0 0
        %2004 = vmatpush1.bf16.msra.mxu0 0
        %2005 = vmatprep.subr.bf16.mxu0 0
        %2006 = vmatpush1.bf16.msra.mxu0 0
        %2007 = vmatprep.subr.bf16.mxu0 0
        %2008 = vmatpush1.bf16.msra.mxu0 0
        %2009 = vmatprep.subr.bf16.mxu0 0
        %2010 = vmatpush1.bf16.msra.mxu0 0
        %2011 = vmatprep.subr.bf16.mxu0 0
        %2012 = vmatpush1.bf16.msra.mxu0 %v1995
        %2013 = vmatprep.subr.bf16.mxu0 0
        %2014 = vmatpush1.bf16.msra.mxu0 %v1994
        %2015 = vmatprep.subr.bf16.mxu0 0
        %2016 = vmatpush1.bf16.msra.mxu0 %v1993
        %2017 = vmatprep.subr.bf16.mxu0 0
        %2018 = vmatpush1.bf16.msra.mxu0 %v1992
        %2019 = vmatprep.subr.bf16.mxu0 0
        %2020 = vmatpush2.bf16.msra.mxu0 0
        %2021 = vmatprep.subr.bf16.mxu0 0
        %2022 = vmatpush2.bf16.msra.mxu0 0
        %2023 = vmatprep.subr.bf16.mxu0 0
        %2024 = vmatpush2.bf16.msra.mxu0 0
        %2025 = vmatprep.subr.bf16.mxu0 0
        %2026 = vmatpush2.bf16.msra.mxu0 0
        %2027 = vmatprep.subr.bf16.mxu0 0
        %2028 = vmatpush2.bf16.msra.mxu0 0
        %2029 = vmatprep.subr.bf16.mxu0 0
        %2030 = vmatpush2.bf16.msra.mxu0 0
        %2031 = vmatprep.subr.bf16.mxu0 0
        %2032 = vmatpush2.bf16.msra.mxu0 0
        %2033 = vmatprep.subr.bf16.mxu0 0
        %2034 = vmatpush2.bf16.msra.mxu0 0
        %2035 = vmatprep.mubr.bf16.mxu0 0
        %2036 = vmatmul.mubr.bf16.gmra.mxu0 %v2001
        %v2037 = vpop.f32.mrf.mxu0
        %v2038 = vadd.f32 %v1974, %v2037
        %v2039 = vpop.f32.mrf.mxu0
        %v2040 = vpop.f32.mrf.mxu0
        %v2041 = vpop.f32.mrf.mxu0
        %2042 = vdwg.mxu0
        %v2043 = vadd.f32 %v2038, %v1879
        %s2044 = scalar_lea.vmem %s14, 1
        %v2045 = vld [vmem:[%s2044] sm:$0x1]
        %s2046 = scalar_lea.vmem %s15, 1
        %v2047 = vld [vmem:[%s2046] sm:$0x1]
        %v2048 = vsel %vm642, %v2043, 0.0
        %2049 = vadd.xlane.f32.xlu0 %v2048
        %v2050 = vpop.xlane.xlu0 %2049
        %v2051 = vmul.f32 %v2050, %v646
        %v2052 = vsub.f32 %v2043, %v2051
        %v2053 = vmul.f32 %v2052, %v2052
        %v2054 = vsel %vm642, %v2053, 0.0
        %2055 = vadd.xlane.f32.xlu0 %v2054
        %v2056 = vpop.xlane.xlu0 %2055
        %v2057 = vmul.f32 %v2056, %v646
        %v2058 = vadd.f32 %v2057, 1e-12
        %v2059 = vrsqrt.pop %v2058
        %v2060 = vmul.f32 %v2052, %v2059
        %v2062 = vlaneseq
        %v2063 = vshrl.u32 %v2062, 7
        %v2064 = vsub.s32 0, %v2063
        %v2065 = vrot.slane %v2045, %v2064
        %v2067 = vmul.f32 %v2060, %v2065
        %v2069 = vlaneseq
        %v2070 = vshrl.u32 %v2069, 7
        %v2071 = vsub.s32 0, %v2070
        %v2072 = vrot.slane %v2047, %v2071
        %v2074 = vadd.f32 %v2067, %v2072
        %v2075 = vpack.c.bf16 %v2074, %v2074
        %v2076 = vld [vmem:[%s16] sm:$0xf]
        %v2077 = vld [vmem:[%s16 + $0x4] sm:$0xf]
        %v2078 = vld [vmem:[%s16 + $0x8] sm:$0xf]
        %v2079 = vld [vmem:[%s16 + $0xc] sm:$0xf]
        %v2080 = vld [vmem:[%s17] sm:$0x1]
        %v2085 = vunpack.c.l.b16 %v2076
        %v2086 = vunpack.c.l.b16 %v2077
        %v2087 = vunpack.c.l.b16 %v2078
        %v2088 = vunpack.c.l.b16 %v2079
        %v2089 = vpack.c.b16 %v2086, %v2085
        %v2090 = vpack.c.b16 %v2088, %v2087
        %v2094 = vsel %vm642, %v2075, 0
        %2096 = vmatprep.subr.bf16.mxu0 0
        %2097 = vmatpush1.bf16.msra.mxu0 0
        %2098 = vmatprep.subr.bf16.mxu0 0
        %2099 = vmatpush1.bf16.msra.mxu0 0
        %2100 = vmatprep.subr.bf16.mxu0 0
        %2101 = vmatpush1.bf16.msra.mxu0 0
        %2102 = vmatprep.subr.bf16.mxu0 0
        %2103 = vmatpush1.bf16.msra.mxu0 0
        %2104 = vmatprep.subr.bf16.mxu0 0
        %2105 = vmatpush1.bf16.msra.mxu0 0
        %2106 = vmatprep.subr.bf16.mxu0 0
        %2107 = vmatpush1.bf16.msra.mxu0 0
        %2108 = vmatprep.subr.bf16.mxu0 0
        %2109 = vmatpush1.bf16.msra.mxu0 %v2090
        %2110 = vmatprep.subr.bf16.mxu0 0
        %2111 = vmatpush1.bf16.msra.mxu0 %v2089
        %2112 = vmatprep.subr.bf16.mxu0 0
        %2113 = vmatpush2.bf16.msra.mxu0 0
        %2114 = vmatprep.subr.bf16.mxu0 0
        %2115 = vmatpush2.bf16.msra.mxu0 0
        %2116 = vmatprep.subr.bf16.mxu0 0
        %2117 = vmatpush2.bf16.msra.mxu0 0
        %2118 = vmatprep.subr.bf16.mxu0 0
        %2119 = vmatpush2.bf16.msra.mxu0 0
        %2120 = vmatprep.subr.bf16.mxu0 0
        %2121 = vmatpush2.bf16.msra.mxu0 0
        %2122 = vmatprep.subr.bf16.mxu0 0
        %2123 = vmatpush2.bf16.msra.mxu0 0
        %2124 = vmatprep.subr.bf16.mxu0 0
        %2125 = vmatpush2.bf16.msra.mxu0 0
        %2126 = vmatprep.subr.bf16.mxu0 0
        %2127 = vmatpush2.bf16.msra.mxu0 0
        %2128 = vmatprep.mubr.bf16.mxu0 0
        %2129 = vmatmul.mubr.bf16.gmra.mxu0 %v2094
        %v2130 = vpop.f32.mrf.mxu0
        %v2131 = vadd.f32 %v2080, %v2130
        %v2132 = vpop.f32.mrf.mxu0
        %v2133 = vpop.f32.mrf.mxu0
        %v2134 = vpop.f32.mrf.mxu0
        %2135 = vdwg.mxu0
        %v2136 = vtanh.pop %v2131
        %v2137 = vpack.c.bf16 %v2136, %v2136
        %v2138 = vld [vmem:[%s18] sm:$0xf]
        %v2139 = vld [vmem:[%s18 + $0x4] sm:$0xf]
        %v2140 = vld [vmem:[%s18 + $0x8] sm:$0xf]
        %v2141 = vld [vmem:[%s18 + $0xc] sm:$0xf]
        %v2142 = vld [vmem:[%s19] sm:$0x1]
        %v2147 = vunpack.c.l.b16 %v2138
        %v2148 = vunpack.c.l.b16 %v2139
        %v2149 = vunpack.c.l.b16 %v2140
        %v2150 = vunpack.c.l.b16 %v2141
        %v2151 = vpack.c.b16 %v2148, %v2147
        %v2152 = vpack.c.b16 %v2150, %v2149
        %v2156 = vsel %vm642, %v2137, 0
        %2158 = vmatprep.subr.bf16.mxu0 0
        %2159 = vmatpush1.bf16.msra.mxu0 0
        %2160 = vmatprep.subr.bf16.mxu0 0
        %2161 = vmatpush1.bf16.msra.mxu0 0
        %2162 = vmatprep.subr.bf16.mxu0 0
        %2163 = vmatpush1.bf16.msra.mxu0 0
        %2164 = vmatprep.subr.bf16.mxu0 0
        %2165 = vmatpush1.bf16.msra.mxu0 0
        %2166 = vmatprep.subr.bf16.mxu0 0
        %2167 = vmatpush1.bf16.msra.mxu0 0
        %2168 = vmatprep.subr.bf16.mxu0 0
        %2169 = vmatpush1.bf16.msra.mxu0 0
        %2170 = vmatprep.subr.bf16.mxu0 0
        %2171 = vmatpush1.bf16.msra.mxu0 %v2152
        %2172 = vmatprep.subr.bf16.mxu0 0
        %2173 = vmatpush1.bf16.msra.mxu0 %v2151
        %2174 = vmatprep.subr.bf16.mxu0 0
        %2175 = vmatpush2.bf16.msra.mxu0 0
        %2176 = vmatprep.subr.bf16.mxu0 0
        %2177 = vmatpush2.bf16.msra.mxu0 0
        %2178 = vmatprep.subr.bf16.mxu0 0
        %2179 = vmatpush2.bf16.msra.mxu0 0
        %2180 = vmatprep.subr.bf16.mxu0 0
        %2181 = vmatpush2.bf16.msra.mxu0 0
        %2182 = vmatprep.subr.bf16.mxu0 0
        %2183 = vmatpush2.bf16.msra.mxu0 0
        %2184 = vmatprep.subr.bf16.mxu0 0
        %2185 = vmatpush2.bf16.msra.mxu0 0
        %2186 = vmatprep.subr.bf16.mxu0 0
        %2187 = vmatpush2.bf16.msra.mxu0 0
        %2188 = vmatprep.subr.bf16.mxu0 0
        %2189 = vmatpush2.bf16.msra.mxu0 0
        %2190 = vmatprep.mubr.bf16.mxu0 0
        %2191 = vmatmul.mubr.bf16.gmra.mxu0 %v2156
        %v2192 = vpop.f32.mrf.mxu0
        %v2193 = vadd.f32 %v2142, %v2192
        %v2194 = vpop.f32.mrf.mxu0
        %v2195 = vpop.f32.mrf.mxu0
        %v2196 = vpop.f32.mrf.mxu0
        %2197 = vdwg.mxu0
        %2198 = vst [vmem:[%s630] sm:$0x1] %v2193
        %s2199 = sand.u32 %s472, 1
        %s2200 = scalar_lea.sflag [#allocation3], %s2199
        %s2201 = sand.u32 %s472, 1
        %s2202 = scalar_lea.vmem [#allocation2], %s2201
        // Predicated region
        $region101: #{bert_sentiment_forward.1} parent=99 // pred_check
          %p2203 = pneg %p482
        $region102: #{bert_sentiment_forward.1} parent=99 // pred_check_branch
          %2205 = sbr.rel (%p2203) target = $region104
        $region103: #{bert_sentiment_forward.1} parent=99 // pred_region
          %s2207 = ssub.s32 16, 16
          %2208 = vsyncadd %s2200, %s2207
          %s2209 = smul.addr %s34, 16
          %s2210 = scalar_lea.hbm %s20, %s2209
          %s2212 = sshll.u32 %s2202, 4
          %s2213 = int_to_ptr.vmem [resolvable:$true] %s2212
          %2215 = dma.vmem_to_hbm [thread:$0]  %s2213, 16, %s2210, %s2200
        $region104: #{bert_sentiment_forward.1} parent=99 // pred_fallthru
          _
      $region100: #{bert_sentiment_forward.1} parent=5 // pred_fallthru
        _
      %p2216 = scmp.le.s32.totalorder 2, %s29
      // Predicated region
      $region105: #{bert_sentiment_forward.1} parent=5 // pred_check
        %p2217 = pneg %p2216
      $region106: #{bert_sentiment_forward.1} parent=5 // pred_check_branch
        %2219 = sbr.rel (%p2217) target = $region108
      $region107: #{bert_sentiment_forward.1} parent=5 // pred_region
        %s2220 = ssub.s32 %s29, 2
        // Predicated region
        $region109: #{bert_sentiment_forward.1} parent=107 // pred_check
          %p2221 = pneg %p488
        $region110: #{bert_sentiment_forward.1} parent=107 // pred_check_branch
          %2223 = sbr.rel (%p2221) target = $region112
        $region111: #{bert_sentiment_forward.1} parent=107 // pred_region
          %s2224 = sand.u32 %s473, 1
          %s2225 = scalar_lea.sflag [#allocation3], %s2224
          %s2226 = sand.u32 %s473, 1
          %s2227 = scalar_lea.vmem [#allocation2], %s2226
          %2228 = dma.done %s2225, 16
        $region112: #{bert_sentiment_forward.1} parent=107 // pred_fallthru
          _
      $region108: #{bert_sentiment_forward.1} parent=5 // pred_fallthru
        _
    $region6: #{bert_sentiment_forward.1} parent=1 // loop_footer
      %s33 = sadd.s32 1, %s29
    $region7: #{bert_sentiment_forward.1} parent=1 // loop_footer_branch
      %28 = sbr.rel target = $region3
    $region8: #{bert_sentiment_forward.1} parent=1 // loop_exit
      _
    %2229 = vsyncpa [#allocation3], 1
    %s2230 = scalar_lea.sflag [#allocation3], 1
    %2231 = vsyncpa %s2230, 1

</llo_original>
